<compile_context>
chip_gen: v6e
topology: v6e:2x2x1
jax: 0.10.0
libtpu: 0.0.40
codegen_flags: <defaults>
</compile_context>

<pallas_src>
import functools

import jax
import jax.numpy as jnp
from jax.experimental import pallas as pl
from jax.experimental.pallas import tpu as pltpu

NEG_INF = -2.0 ** 32 + 1.0  # matches torch.where(attn_mask, 0.0, -2**32 + 1.0)


def _leaky_relu(y):
    # LeakyReLU(0.2) == max(y, 0.2*y) for slope < 1 (mul + max, no select).
    return jnp.maximum(y, 0.2 * y)


def _attention_core(qp, kp, vp, qm_ref, km_ref, o_ref, *, num_heads):
    """Shared attention body. qp/kp/vp are f32 [Bt*L, D] projected activations."""
    Bt, L, D = o_ref.shape
    H = num_heads
    Dh = D // H
    inv_scale = 1.0 / float(Dh) ** 0.5

    # Fold 1/sqrt(Dh) into Q once (MXU inputs bf16, f32 accumulate).
    qp_b = (qp * inv_scale).astype(jnp.bfloat16)
    kp_b = kp.astype(jnp.bfloat16)
    vp_b = vp.astype(jnp.bfloat16)

    for bi in range(Bt):                      # static unroll over batch-in-block
        qm_col = qm_ref[bi]                   # [L, 1] f32 (1 = valid query token)
        # Key-only additive mask; q-masked rows are zeroed by `* qm_col` below.
        add_mask = jnp.where(km_ref[bi] != 0.0, 0.0, NEG_INF)   # [1, L] f32

        rows = slice(bi * L, (bi + 1) * L)
        q_i = qp_b[rows]                      # [L, D] bf16
        k_i = kp_b[rows]
        v_i = vp_b[rows]

        for h in range(H):                    # static unroll over heads
            sl = slice(h * Dh, (h + 1) * Dh)
            s = jax.lax.dot_general(q_i[:, sl], k_i[:, sl],
                                    (((1,), (1,)), ((), ())),
                                    preferred_element_type=jnp.float32)  # [L, L]
            s = s + add_mask

            # softmax over the last dim (f32 elementwise; EUP reciprocal).
            m = jnp.max(s, axis=-1, keepdims=True)
            e = jnp.exp(s - m)
            p = e * pl.reciprocal(jnp.sum(e, axis=-1, keepdims=True), approx=True)

            o = jnp.dot(p.astype(jnp.bfloat16), v_i[:, sl],
                        preferred_element_type=jnp.float32)             # [L, Dh]
            # weight_mask row scaling commutes past the V matmul; apply here and
            # write directly into the head's output lane slice (no concat).
            o_ref[bi, :, sl] = (o * qm_col).astype(o_ref.dtype)


def _mha_self_kernel(x_ref, w3_ref, b3_ref, qm_ref, km_ref, o_ref, *, num_heads):
    """Self-attention path: one fused [Bt*L, D] @ [D, 3D] projection."""
    Bt, L, D = x_ref.shape
    x = x_ref[...].reshape(Bt * L, D)
    y = jnp.dot(x, w3_ref[...], preferred_element_type=jnp.float32) + b3_ref[...]
    y = _leaky_relu(y)
    qp = y[:, :D]
    kp = y[:, D:2 * D]
    vp = y[:, 2 * D:]
    _attention_core(qp, kp, vp, qm_ref, km_ref, o_ref, num_heads=num_heads)


def _mha_cross_kernel(q_ref, k_ref, v_ref,
                      wq_ref, wk_ref, wv_ref,
                      bq_ref, bk_ref, bv_ref,
                      qm_ref, km_ref, o_ref, *, num_heads):
    """General path: distinct query/key/value inputs, three projections."""
    Bt, L, D = q_ref.shape

    def proj(x_ref, w_ref, b_ref):
        y = jnp.dot(x_ref[...].reshape(Bt * L, D), w_ref[...],
                    preferred_element_type=jnp.float32) + b_ref[...]
        return _leaky_relu(y)

    qp = proj(q_ref, wq_ref, bq_ref)
    kp = proj(k_ref, wk_ref, bk_ref)
    vp = proj(v_ref, wv_ref, bv_ref)
    _attention_core(qp, kp, vp, qm_ref, km_ref, o_ref, num_heads=num_heads)


def multi_head_attention(query, key, value, q_mask, k_mask, params, num_heads,
                         *, block_b=None):
    B, L, D = query.shape
    H = num_heads
    assert D % H == 0
    WQ, bQ, WK, bK, WV, bV = params
    compute_dtype = jnp.bfloat16

    self_attn = (query is key) and (query is value)

    # Batch tile: aim for Bt*L >= 256 MXU rows per grid step; `block_b` lets the
    # caller force an even grid length on v7x (2 TensorCores per chip).
    if block_b is None:
        bt = max(1, min(B, -(-256 // L)))
    else:
        bt = max(1, min(B, block_b))
    n_blk = -(-B // bt)
    Bp = n_blk * bt

    def pad_b(x, fill=0.0):
        if Bp == B:
            return x
        pad = [(0, Bp - B)] + [(0, 0)] * (x.ndim - 1)
        return jnp.pad(x, pad, constant_values=fill)

    qm3 = pad_b(q_mask.astype(jnp.float32).reshape(B, L, 1))            # col mask
    km3 = pad_b(k_mask.astype(jnp.float32).reshape(B, 1, L), fill=1.0)  # row mask

    x_spec = pl.BlockSpec((bt, L, D), lambda b: (b, 0, 0))
    w_spec = pl.BlockSpec((D, D), lambda b: (0, 0))          # resident across grid
    w3_spec = pl.BlockSpec((D, 3 * D), lambda b: (0, 0))
    b_spec = pl.BlockSpec((1, D), lambda b: (0, 0))
    b3_spec = pl.BlockSpec((1, 3 * D), lambda b: (0, 0))
    qm_spec = pl.BlockSpec((bt, L, 1), lambda b: (b, 0, 0))
    km_spec = pl.BlockSpec((bt, 1, L), lambda b: (b, 0, 0))
    out_spec = pl.BlockSpec((bt, L, D), lambda b: (b, 0, 0))

    flops = Bp * (6 * L * D * D + 4 * L * L * D)
    transcendentals = Bp * H * L * L

    if self_attn:
        x_b = pad_b(query.astype(compute_dtype))
        # torch Linear weight is [out, in]; pre-transpose and fuse Q|K|V columns.
        w3 = jnp.concatenate([WQ.T, WK.T, WV.T], axis=1).astype(compute_dtype)
        b3 = jnp.concatenate([bQ, bK, bV]).reshape(1, 3 * D).astype(jnp.float32)
        bytes_accessed = (Bp * L * D + 3 * D * D) * 2 + 3 * D * 4 \
            + Bp * L * D * 4 + 2 * Bp * L * 4
        out = pl.pallas_call(
            functools.partial(_mha_self_kernel, num_heads=H),
            out_shape=jax.ShapeDtypeStruct((Bp, L, D), query.dtype),
            grid=(n_blk,),
            in_specs=[x_spec, w3_spec, b3_spec, qm_spec, km_spec],
            out_specs=out_spec,
            compiler_params=pltpu.CompilerParams(
                dimension_semantics=("parallel",)),
            cost_estimate=pl.CostEstimate(flops=flops,
                                          transcendentals=transcendentals,
                                          bytes_accessed=bytes_accessed),
        )(x_b, w3, b3, qm3, km3)
    else:
        q_b = pad_b(query.astype(compute_dtype))
        k_b = pad_b(key.astype(compute_dtype))
        v_b = pad_b(value.astype(compute_dtype))
        wq_t = WQ.T.astype(compute_dtype)
        wk_t = WK.T.astype(compute_dtype)
        wv_t = WV.T.astype(compute_dtype)
        bq = bQ.reshape(1, D).astype(jnp.float32)
        bk = bK.reshape(1, D).astype(jnp.float32)
        bv = bV.reshape(1, D).astype(jnp.float32)
        bytes_accessed = (3 * Bp * L * D + 3 * D * D) * 2 + 3 * D * 4 \
            + Bp * L * D * 4 + 2 * Bp * L * 4
        out = pl.pallas_call(
            functools.partial(_mha_cross_kernel, num_heads=H),
            out_shape=jax.ShapeDtypeStruct((Bp, L, D), query.dtype),
            grid=(n_blk,),
            in_specs=[x_spec, x_spec, x_spec,
                      w_spec, w_spec, w_spec,
                      b_spec, b_spec, b_spec,
                      qm_spec, km_spec],
            out_specs=out_spec,
            compiler_params=pltpu.CompilerParams(
                dimension_semantics=("parallel",)),
            cost_estimate=pl.CostEstimate(flops=flops,
                                          transcendentals=transcendentals,
                                          bytes_accessed=bytes_accessed),
        )(q_b, k_b, v_b, wq_t, wk_t, wv_t, bq, bk, bv, qm3, km3)

    return out[:B] if Bp != B else out


def _reference_forward(query, key, value, q_mask, k_mask, params, H):
    """Pure-JAX (f32) mirror of the PyTorch forward (for correctness check)."""
    WQ, bQ, WK, bK, WV, bV = params

    def lin_lrelu(x, W, b):
        y = x @ W.T + b
        return jnp.where(y >= 0.0, y, 0.2 * y)

    q = lin_lrelu(query, WQ, bQ)
    k = lin_lrelu(key, WK, bK)
    v = lin_lrelu(value, WV, bV)
    D = q.shape[-1]
    dh = D // H
    qh = jnp.concatenate(jnp.split(q, H, axis=2), axis=0)
    kh = jnp.concatenate(jnp.split(k, H, axis=2), axis=0)
    vh = jnp.concatenate(jnp.split(v, H, axis=2), axis=0)
    attn_mask = (jnp.einsum('bq,bk->bqk', q_mask, k_mask) != 0.0)
    attn_mask = jnp.tile(attn_mask, (H, 1, 1))
    add_mask = jnp.where(attn_mask, 0.0, NEG_INF)
    out = (add_mask + jnp.einsum('bqd,bkd->bqk', qh, kh)) / jnp.sqrt(jnp.float32(dh))
    out = jax.nn.softmax(out, axis=-1)
    out = out * jnp.tile(q_mask, (H, 1))[:, :, None]
    out = jnp.einsum('bqk,bkd->bqd', out, vh)
    return jnp.concatenate(jnp.split(out, H, axis=0), axis=2)


def _xavier_uniform(key, shape):
    fan_out, fan_in = shape
    limit = (6.0 / (fan_in + fan_out)) ** 0.5
    return jax.random.uniform(key, shape, jnp.float32, -limit, limit)


if __name__ == "__main__":
    B, L, D, H = 2, 8, 32, 4
    dropout = 0.1  # unused at inference

    root = jax.random.PRNGKey(0)
    kx, kq, kk, kv, kwq, kwk, kwv = jax.random.split(root, 7)

    x = jax.random.normal(kx, (B, L, D), jnp.float32)        # self-attention input
    query = jax.random.normal(kq, (B, L, D), jnp.float32)    # cross-attention inputs
    key = jax.random.normal(kk, (B, L, D), jnp.float32)
    value = jax.random.normal(kv, (B, L, D), jnp.float32)

    # padding masks (1.0 = valid token, 0.0 = padded)
    q_mask = jnp.array([[1.0] * L,
                        [1.0] * 5 + [0.0] * (L - 5)], jnp.float32)
    k_mask = jnp.array([[1.0] * L,
                        [1.0] * 5 + [0.0] * (L - 5)], jnp.float32)

    params = (
        _xavier_uniform(kwq, (D, D)), jnp.zeros((D,), jnp.float32),  # WQ, bQ
        _xavier_uniform(kwk, (D, D)), jnp.zeros((D,), jnp.float32),  # WK, bK
        _xavier_uniform(kwv, (D, D)), jnp.zeros((D,), jnp.float32),  # WV, bV
    )

    # Self-attention (fused QKV weight path — the common CARCA call site).
    out_self = multi_head_attention(x, x, x, q_mask, k_mask, params, H)
    out_self = jax.block_until_ready(out_self)
    ref_self = _reference_forward(x, x, x, q_mask, k_mask, params, H)
    assert out_self.shape == (B, L, D)
    # bf16 MXU operands (f32 accumulate) + approx reciprocal vs pure-f32 reference.
    assert jnp.allclose(out_self, ref_self, atol=5e-2, rtol=5e-2), \
        "self-attention mismatch vs. reference"

    # Cross-attention (distinct query/key/value path).
    out_cross = multi_head_attention(query, key, value, q_mask, k_mask, params, H)
    out_cross = jax.block_until_ready(out_cross)
    ref_cross = _reference_forward(query, key, value, q_mask, k_mask, params, H)
    assert out_cross.shape == (B, L, D)
    assert jnp.allclose(out_cross, ref_cross, atol=5e-2, rtol=5e-2), \
        "cross-attention mismatch vs. reference"

    print("KERNEL_OK")
</pallas_src>

<mosaic_0001>
module attributes {stable_mosaic.version = 11 : i64} {
  func.func @_mha_self_kernel(%arg0: i32, %arg1: memref<2x8x32xbf16, #tpu.memory_space<vmem>>, %arg2: memref<32x96xbf16, #tpu.memory_space<vmem>>, %arg3: memref<1x96xf32, #tpu.memory_space<vmem>>, %arg4: memref<2x8x1xf32, #tpu.memory_space<vmem>>, %arg5: memref<2x1x8xf32, #tpu.memory_space<vmem>>, %arg6: memref<2x8x32xf32, #tpu.memory_space<vmem>>) attributes {dimension_semantics = [#tpu.dimension_semantics<parallel>], iteration_bounds = array<i64: 1>, scalar_prefetch = 0 : i64, scratch_operands = 0 : i64, tpu.core_type = #tpu.core_type<tc>, window_params = [{transform_indices = @transform_0, window_bounds = array<i64: 2, 8, 32>}, {pipeline_mode = #tpu.pipeline_mode<synchronous>, transform_indices = @transform_1, window_bounds = array<i64: 32, 96>}, {pipeline_mode = #tpu.pipeline_mode<synchronous>, transform_indices = @transform_2, window_bounds = array<i64: 1, 96>}, {transform_indices = @transform_3, window_bounds = array<i64: 2, 8, 1>}, {transform_indices = @transform_4, window_bounds = array<i64: 2, 1, 8>}, {transform_indices = @transform_5, window_bounds = array<i64: 2, 8, 32>}]} {
    %c0 = arith.constant 0 : index
    %c0_0 = arith.constant 0 : index
    %c0_1 = arith.constant 0 : index
    %0 = vector.load %arg1[%c0, %c0_0, %c0_1] : memref<2x8x32xbf16, #tpu.memory_space<vmem>>, vector<2x8x32xbf16>
    %1 = vector.shape_cast %0 : vector<2x8x32xbf16> to vector<16x32xbf16>
    %c0_2 = arith.constant 0 : index
    %c0_3 = arith.constant 0 : index
    %2 = vector.load %arg2[%c0_2, %c0_3] : memref<32x96xbf16, #tpu.memory_space<vmem>>, vector<32x96xbf16>
    %cst = arith.constant dense<0.000000e+00> : vector<16x96xf32>
    %3 = tpu.matmul %1, %2, %cst {dimension_numbers = #tpu.dot_dimension_numbers<[1], [0], [0], [1], [0, 0, 1, 1], [], []>} : vector<16x32xbf16>, vector<32x96xbf16>, vector<16x96xf32> -> vector<16x96xf32>
    %c0_4 = arith.constant 0 : index
    %c0_5 = arith.constant 0 : index
    %4 = vector.load %arg3[%c0_4, %c0_5] : memref<1x96xf32, #tpu.memory_space<vmem>>, vector<1x96xf32>
    %5 = vector.broadcast %4 : vector<1x96xf32> to vector<16x96xf32>
    %6 = arith.addf %3, %5 : vector<16x96xf32>
    %cst_6 = arith.constant 2.000000e-01 : f32
    %7 = vector.broadcast %cst_6 : f32 to vector<16x96xf32>
    %8 = arith.mulf %7, %6 : vector<16x96xf32>
    %9 = arith.maximumf %6, %8 : vector<16x96xf32>
    %10 = vector.extract_strided_slice %9 {offsets = [0, 0], sizes = [16, 32], strides = [1, 1]} : vector<16x96xf32> to vector<16x32xf32>
    %11 = vector.extract_strided_slice %9 {offsets = [0, 32], sizes = [16, 32], strides = [1, 1]} : vector<16x96xf32> to vector<16x32xf32>
    %12 = vector.extract_strided_slice %9 {offsets = [0, 64], sizes = [16, 32], strides = [1, 1]} : vector<16x96xf32> to vector<16x32xf32>
    %cst_7 = arith.constant 0.353553385 : f32
    %13 = vector.broadcast %cst_7 : f32 to vector<16x32xf32>
    %14 = arith.mulf %10, %13 : vector<16x32xf32>
    %15 = arith.truncf %14 : vector<16x32xf32> to vector<16x32xbf16>
    %16 = arith.truncf %11 : vector<16x32xf32> to vector<16x32xbf16>
    %17 = arith.truncf %12 : vector<16x32xf32> to vector<16x32xbf16>
    %c0_8 = arith.constant 0 : index
    %c0_9 = arith.constant 0 : index
    %c0_10 = arith.constant 0 : index
    %18 = vector.load %arg4[%c0_8, %c0_9, %c0_10] : memref<2x8x1xf32, #tpu.memory_space<vmem>>, vector<1x8x1xf32>
    %19 = vector.shape_cast %18 : vector<1x8x1xf32> to vector<8x1xf32>
    %c0_11 = arith.constant 0 : index
    %c0_12 = arith.constant 0 : index
    %c0_13 = arith.constant 0 : index
    %20 = vector.load %arg5[%c0_11, %c0_12, %c0_13] : memref<2x1x8xf32, #tpu.memory_space<vmem>>, vector<1x1x8xf32>
    %21 = vector.shape_cast %20 : vector<1x1x8xf32> to vector<1x8xf32>
    %cst_14 = arith.constant 0.000000e+00 : f32
    %22 = vector.broadcast %cst_14 : f32 to vector<1x8xf32>
    %23 = arith.cmpf one, %21, %22 : vector<1x8xf32>
    %cst_15 = arith.constant 0.000000e+00 : f32
    %cst_16 = arith.constant -4.2949673E+9 : f32
    %24 = vector.broadcast %cst_15 : f32 to vector<1x8xf32>
    %25 = vector.broadcast %cst_16 : f32 to vector<1x8xf32>
    %26 = arith.select %23, %24, %25 : vector<1x8xi1>, vector<1x8xf32>
    %27 = vector.extract_strided_slice %15 {offsets = [0, 0], sizes = [8, 32], strides = [1, 1]} : vector<16x32xbf16> to vector<8x32xbf16>
    %28 = vector.extract_strided_slice %16 {offsets = [0, 0], sizes = [8, 32], strides = [1, 1]} : vector<16x32xbf16> to vector<8x32xbf16>
    %29 = vector.extract_strided_slice %17 {offsets = [0, 0], sizes = [8, 32], strides = [1, 1]} : vector<16x32xbf16> to vector<8x32xbf16>
    %30 = vector.extract_strided_slice %27 {offsets = [0, 0], sizes = [8, 8], strides = [1, 1]} : vector<8x32xbf16> to vector<8x8xbf16>
    %31 = vector.extract_strided_slice %28 {offsets = [0, 0], sizes = [8, 8], strides = [1, 1]} : vector<8x32xbf16> to vector<8x8xbf16>
    %cst_17 = arith.constant dense<0.000000e+00> : vector<8x8xf32>
    %32 = tpu.matmul %30, %31, %cst_17 {dimension_numbers = #tpu.dot_dimension_numbers<[1], [1], [0], [0], [0, 0, 1, 0], [], []>} : vector<8x8xbf16>, vector<8x8xbf16>, vector<8x8xf32> -> vector<8x8xf32>
    %33 = vector.broadcast %26 : vector<1x8xf32> to vector<8x8xf32>
    %34 = arith.addf %32, %33 : vector<8x8xf32>
    %cst_18 = arith.constant dense<0xFF800000> : vector<8xf32>
    %35 = vector.multi_reduction <maximumf>, %34, %cst_18 [1] : vector<8x8xf32> to vector<8xf32>
    %36 = vector.shape_cast %35 : vector<8xf32> to vector<8x1xf32>
    %37 = vector.broadcast %36 : vector<8x1xf32> to vector<8x8xf32>
    %38 = arith.subf %34, %37 : vector<8x8xf32>
    %39 = math.exp %38 : vector<8x8xf32>
    %cst_19 = arith.constant dense<0.000000e+00> : vector<8xf32>
    %40 = vector.multi_reduction <add>, %39, %cst_19 [1] : vector<8x8xf32> to vector<8xf32>
    %41 = vector.shape_cast %40 : vector<8xf32> to vector<8x1xf32>
    %42 = tpu.reciprocal %41 {approx = true} : vector<8x1xf32> -> vector<8x1xf32>
    %43 = vector.broadcast %42 : vector<8x1xf32> to vector<8x8xf32>
    %44 = arith.mulf %39, %43 : vector<8x8xf32>
    %45 = arith.truncf %44 : vector<8x8xf32> to vector<8x8xbf16>
    %46 = vector.extract_strided_slice %29 {offsets = [0, 0], sizes = [8, 8], strides = [1, 1]} : vector<8x32xbf16> to vector<8x8xbf16>
    %cst_20 = arith.constant dense<0.000000e+00> : vector<8x8xf32>
    %47 = tpu.matmul %45, %46, %cst_20 {dimension_numbers = #tpu.dot_dimension_numbers<[1], [0], [0], [1], [0, 0, 1, 1], [], []>} : vector<8x8xbf16>, vector<8x8xbf16>, vector<8x8xf32> -> vector<8x8xf32>
    %48 = vector.broadcast %19 : vector<8x1xf32> to vector<8x8xf32>
    %49 = arith.mulf %47, %48 : vector<8x8xf32>
    %c0_21 = arith.constant 0 : index
    %c0_22 = arith.constant 0 : index
    %c0_23 = arith.constant 0 : index
    %50 = vector.load %arg6[%c0_21, %c0_22, %c0_23] : memref<2x8x32xf32, #tpu.memory_space<vmem>>, vector<1x8x8xf32>
    %51 = vector.shape_cast %50 : vector<1x8x8xf32> to vector<8x8xf32>
    %52 = vector.shape_cast %49 : vector<8x8xf32> to vector<1x8x8xf32>
    tpu.vector_store %arg6[%c0_21, %c0_22, %c0_23], %52 {strides = array<i32>} : memref<2x8x32xf32, #tpu.memory_space<vmem>>, vector<1x8x8xf32>,
    %53 = vector.extract_strided_slice %27 {offsets = [0, 8], sizes = [8, 8], strides = [1, 1]} : vector<8x32xbf16> to vector<8x8xbf16>
    %54 = vector.extract_strided_slice %28 {offsets = [0, 8], sizes = [8, 8], strides = [1, 1]} : vector<8x32xbf16> to vector<8x8xbf16>
    %cst_24 = arith.constant dense<0.000000e+00> : vector<8x8xf32>
    %55 = tpu.matmul %53, %54, %cst_24 {dimension_numbers = #tpu.dot_dimension_numbers<[1], [1], [0], [0], [0, 0, 1, 0], [], []>} : vector<8x8xbf16>, vector<8x8xbf16>, vector<8x8xf32> -> vector<8x8xf32>
    %56 = vector.broadcast %26 : vector<1x8xf32> to vector<8x8xf32>
    %57 = arith.addf %55, %56 : vector<8x8xf32>
    %cst_25 = arith.constant dense<0xFF800000> : vector<8xf32>
    %58 = vector.multi_reduction <maximumf>, %57, %cst_25 [1] : vector<8x8xf32> to vector<8xf32>
    %59 = vector.shape_cast %58 : vector<8xf32> to vector<8x1xf32>
    %60 = vector.broadcast %59 : vector<8x1xf32> to vector<8x8xf32>
    %61 = arith.subf %57, %60 : vector<8x8xf32>
    %62 = math.exp %61 : vector<8x8xf32>
    %cst_26 = arith.constant dense<0.000000e+00> : vector<8xf32>
    %63 = vector.multi_reduction <add>, %62, %cst_26 [1] : vector<8x8xf32> to vector<8xf32>
    %64 = vector.shape_cast %63 : vector<8xf32> to vector<8x1xf32>
    %65 = tpu.reciprocal %64 {approx = true} : vector<8x1xf32> -> vector<8x1xf32>
    %66 = vector.broadcast %65 : vector<8x1xf32> to vector<8x8xf32>
    %67 = arith.mulf %62, %66 : vector<8x8xf32>
    %68 = arith.truncf %67 : vector<8x8xf32> to vector<8x8xbf16>
    %69 = vector.extract_strided_slice %29 {offsets = [0, 8], sizes = [8, 8], strides = [1, 1]} : vector<8x32xbf16> to vector<8x8xbf16>
    %cst_27 = arith.constant dense<0.000000e+00> : vector<8x8xf32>
    %70 = tpu.matmul %68, %69, %cst_27 {dimension_numbers = #tpu.dot_dimension_numbers<[1], [0], [0], [1], [0, 0, 1, 1], [], []>} : vector<8x8xbf16>, vector<8x8xbf16>, vector<8x8xf32> -> vector<8x8xf32>
    %71 = vector.broadcast %19 : vector<8x1xf32> to vector<8x8xf32>
    %72 = arith.mulf %70, %71 : vector<8x8xf32>
    %c0_28 = arith.constant 0 : index
    %c0_29 = arith.constant 0 : index
    %c8 = arith.constant 8 : index
    %73 = vector.load %arg6[%c0_28, %c0_29, %c8] : memref<2x8x32xf32, #tpu.memory_space<vmem>>, vector<1x8x8xf32>
    %74 = vector.shape_cast %73 : vector<1x8x8xf32> to vector<8x8xf32>
    %75 = vector.shape_cast %72 : vector<8x8xf32> to vector<1x8x8xf32>
    tpu.vector_store %arg6[%c0_28, %c0_29, %c8], %75 {strides = array<i32>} : memref<2x8x32xf32, #tpu.memory_space<vmem>>, vector<1x8x8xf32>,
    %76 = vector.extract_strided_slice %27 {offsets = [0, 16], sizes = [8, 8], strides = [1, 1]} : vector<8x32xbf16> to vector<8x8xbf16>
    %77 = vector.extract_strided_slice %28 {offsets = [0, 16], sizes = [8, 8], strides = [1, 1]} : vector<8x32xbf16> to vector<8x8xbf16>
    %cst_30 = arith.constant dense<0.000000e+00> : vector<8x8xf32>
    %78 = tpu.matmul %76, %77, %cst_30 {dimension_numbers = #tpu.dot_dimension_numbers<[1], [1], [0], [0], [0, 0, 1, 0], [], []>} : vector<8x8xbf16>, vector<8x8xbf16>, vector<8x8xf32> -> vector<8x8xf32>
    %79 = vector.broadcast %26 : vector<1x8xf32> to vector<8x8xf32>
    %80 = arith.addf %78, %79 : vector<8x8xf32>
    %cst_31 = arith.constant dense<0xFF800000> : vector<8xf32>
    %81 = vector.multi_reduction <maximumf>, %80, %cst_31 [1] : vector<8x8xf32> to vector<8xf32>
    %82 = vector.shape_cast %81 : vector<8xf32> to vector<8x1xf32>
    %83 = vector.broadcast %82 : vector<8x1xf32> to vector<8x8xf32>
    %84 = arith.subf %80, %83 : vector<8x8xf32>
    %85 = math.exp %84 : vector<8x8xf32>
    %cst_32 = arith.constant dense<0.000000e+00> : vector<8xf32>
    %86 = vector.multi_reduction <add>, %85, %cst_32 [1] : vector<8x8xf32> to vector<8xf32>
    %87 = vector.shape_cast %86 : vector<8xf32> to vector<8x1xf32>
    %88 = tpu.reciprocal %87 {approx = true} : vector<8x1xf32> -> vector<8x1xf32>
    %89 = vector.broadcast %88 : vector<8x1xf32> to vector<8x8xf32>
    %90 = arith.mulf %85, %89 : vector<8x8xf32>
    %91 = arith.truncf %90 : vector<8x8xf32> to vector<8x8xbf16>
    %92 = vector.extract_strided_slice %29 {offsets = [0, 16], sizes = [8, 8], strides = [1, 1]} : vector<8x32xbf16> to vector<8x8xbf16>
    %cst_33 = arith.constant dense<0.000000e+00> : vector<8x8xf32>
    %93 = tpu.matmul %91, %92, %cst_33 {dimension_numbers = #tpu.dot_dimension_numbers<[1], [0], [0], [1], [0, 0, 1, 1], [], []>} : vector<8x8xbf16>, vector<8x8xbf16>, vector<8x8xf32> -> vector<8x8xf32>
    %94 = vector.broadcast %19 : vector<8x1xf32> to vector<8x8xf32>
    %95 = arith.mulf %93, %94 : vector<8x8xf32>
    %c0_34 = arith.constant 0 : index
    %c0_35 = arith.constant 0 : index
    %c16 = arith.constant 16 : index
    %96 = vector.load %arg6[%c0_34, %c0_35, %c16] : memref<2x8x32xf32, #tpu.memory_space<vmem>>, vector<1x8x8xf32>
    %97 = vector.shape_cast %96 : vector<1x8x8xf32> to vector<8x8xf32>
    %98 = vector.shape_cast %95 : vector<8x8xf32> to vector<1x8x8xf32>
    tpu.vector_store %arg6[%c0_34, %c0_35, %c16], %98 {strides = array<i32>} : memref<2x8x32xf32, #tpu.memory_space<vmem>>, vector<1x8x8xf32>,
    %99 = vector.extract_strided_slice %27 {offsets = [0, 24], sizes = [8, 8], strides = [1, 1]} : vector<8x32xbf16> to vector<8x8xbf16>
    %100 = vector.extract_strided_slice %28 {offsets = [0, 24], sizes = [8, 8], strides = [1, 1]} : vector<8x32xbf16> to vector<8x8xbf16>
    %cst_36 = arith.constant dense<0.000000e+00> : vector<8x8xf32>
    %101 = tpu.matmul %99, %100, %cst_36 {dimension_numbers = #tpu.dot_dimension_numbers<[1], [1], [0], [0], [0, 0, 1, 0], [], []>} : vector<8x8xbf16>, vector<8x8xbf16>, vector<8x8xf32> -> vector<8x8xf32>
    %102 = vector.broadcast %26 : vector<1x8xf32> to vector<8x8xf32>
    %103 = arith.addf %101, %102 : vector<8x8xf32>
    %cst_37 = arith.constant dense<0xFF800000> : vector<8xf32>
    %104 = vector.multi_reduction <maximumf>, %103, %cst_37 [1] : vector<8x8xf32> to vector<8xf32>
    %105 = vector.shape_cast %104 : vector<8xf32> to vector<8x1xf32>
    %106 = vector.broadcast %105 : vector<8x1xf32> to vector<8x8xf32>
    %107 = arith.subf %103, %106 : vector<8x8xf32>
    %108 = math.exp %107 : vector<8x8xf32>
    %cst_38 = arith.constant dense<0.000000e+00> : vector<8xf32>
    %109 = vector.multi_reduction <add>, %108, %cst_38 [1] : vector<8x8xf32> to vector<8xf32>
    %110 = vector.shape_cast %109 : vector<8xf32> to vector<8x1xf32>
    %111 = tpu.reciprocal %110 {approx = true} : vector<8x1xf32> -> vector<8x1xf32>
    %112 = vector.broadcast %111 : vector<8x1xf32> to vector<8x8xf32>
    %113 = arith.mulf %108, %112 : vector<8x8xf32>
    %114 = arith.truncf %113 : vector<8x8xf32> to vector<8x8xbf16>
    %115 = vector.extract_strided_slice %29 {offsets = [0, 24], sizes = [8, 8], strides = [1, 1]} : vector<8x32xbf16> to vector<8x8xbf16>
    %cst_39 = arith.constant dense<0.000000e+00> : vector<8x8xf32>
    %116 = tpu.matmul %114, %115, %cst_39 {dimension_numbers = #tpu.dot_dimension_numbers<[1], [0], [0], [1], [0, 0, 1, 1], [], []>} : vector<8x8xbf16>, vector<8x8xbf16>, vector<8x8xf32> -> vector<8x8xf32>
    %117 = vector.broadcast %19 : vector<8x1xf32> to vector<8x8xf32>
    %118 = arith.mulf %116, %117 : vector<8x8xf32>
    %c0_40 = arith.constant 0 : index
    %c0_41 = arith.constant 0 : index
    %c24 = arith.constant 24 : index
    %119 = vector.load %arg6[%c0_40, %c0_41, %c24] : memref<2x8x32xf32, #tpu.memory_space<vmem>>, vector<1x8x8xf32>
    %120 = vector.shape_cast %119 : vector<1x8x8xf32> to vector<8x8xf32>
    %121 = vector.shape_cast %118 : vector<8x8xf32> to vector<1x8x8xf32>
    tpu.vector_store %arg6[%c0_40, %c0_41, %c24], %121 {strides = array<i32>} : memref<2x8x32xf32, #tpu.memory_space<vmem>>, vector<1x8x8xf32>,
    %c1 = arith.constant 1 : index
    %c0_42 = arith.constant 0 : index
    %c0_43 = arith.constant 0 : index
    %122 = vector.load %arg4[%c1, %c0_42, %c0_43] : memref<2x8x1xf32, #tpu.memory_space<vmem>>, vector<1x8x1xf32>
    %123 = vector.shape_cast %122 : vector<1x8x1xf32> to vector<8x1xf32>
    %c1_44 = arith.constant 1 : index
    %c0_45 = arith.constant 0 : index
    %c0_46 = arith.constant 0 : index
    %124 = vector.load %arg5[%c1_44, %c0_45, %c0_46] : memref<2x1x8xf32, #tpu.memory_space<vmem>>, vector<1x1x8xf32>
    %125 = vector.shape_cast %124 : vector<1x1x8xf32> to vector<1x8xf32>
    %cst_47 = arith.constant 0.000000e+00 : f32
    %126 = vector.broadcast %cst_47 : f32 to vector<1x8xf32>
    %127 = arith.cmpf one, %125, %126 : vector<1x8xf32>
    %cst_48 = arith.constant 0.000000e+00 : f32
    %cst_49 = arith.constant -4.2949673E+9 : f32
    %128 = vector.broadcast %cst_48 : f32 to vector<1x8xf32>
    %129 = vector.broadcast %cst_49 : f32 to vector<1x8xf32>
    %130 = arith.select %127, %128, %129 : vector<1x8xi1>, vector<1x8xf32>
    %131 = vector.extract_strided_slice %15 {offsets = [8, 0], sizes = [8, 32], strides = [1, 1]} : vector<16x32xbf16> to vector<8x32xbf16>
    %132 = vector.extract_strided_slice %16 {offsets = [8, 0], sizes = [8, 32], strides = [1, 1]} : vector<16x32xbf16> to vector<8x32xbf16>
    %133 = vector.extract_strided_slice %17 {offsets = [8, 0], sizes = [8, 32], strides = [1, 1]} : vector<16x32xbf16> to vector<8x32xbf16>
    %134 = vector.extract_strided_slice %131 {offsets = [0, 0], sizes = [8, 8], strides = [1, 1]} : vector<8x32xbf16> to vector<8x8xbf16>
    %135 = vector.extract_strided_slice %132 {offsets = [0, 0], sizes = [8, 8], strides = [1, 1]} : vector<8x32xbf16> to vector<8x8xbf16>
    %cst_50 = arith.constant dense<0.000000e+00> : vector<8x8xf32>
    %136 = tpu.matmul %134, %135, %cst_50 {dimension_numbers = #tpu.dot_dimension_numbers<[1], [1], [0], [0], [0, 0, 1, 0], [], []>} : vector<8x8xbf16>, vector<8x8xbf16>, vector<8x8xf32> -> vector<8x8xf32>
    %137 = vector.broadcast %130 : vector<1x8xf32> to vector<8x8xf32>
    %138 = arith.addf %136, %137 : vector<8x8xf32>
    %cst_51 = arith.constant dense<0xFF800000> : vector<8xf32>
    %139 = vector.multi_reduction <maximumf>, %138, %cst_51 [1] : vector<8x8xf32> to vector<8xf32>
    %140 = vector.shape_cast %139 : vector<8xf32> to vector<8x1xf32>
    %141 = vector.broadcast %140 : vector<8x1xf32> to vector<8x8xf32>
    %142 = arith.subf %138, %141 : vector<8x8xf32>
    %143 = math.exp %142 : vector<8x8xf32>
    %cst_52 = arith.constant dense<0.000000e+00> : vector<8xf32>
    %144 = vector.multi_reduction <add>, %143, %cst_52 [1] : vector<8x8xf32> to vector<8xf32>
    %145 = vector.shape_cast %144 : vector<8xf32> to vector<8x1xf32>
    %146 = tpu.reciprocal %145 {approx = true} : vector<8x1xf32> -> vector<8x1xf32>
    %147 = vector.broadcast %146 : vector<8x1xf32> to vector<8x8xf32>
    %148 = arith.mulf %143, %147 : vector<8x8xf32>
    %149 = arith.truncf %148 : vector<8x8xf32> to vector<8x8xbf16>
    %150 = vector.extract_strided_slice %133 {offsets = [0, 0], sizes = [8, 8], strides = [1, 1]} : vector<8x32xbf16> to vector<8x8xbf16>
    %cst_53 = arith.constant dense<0.000000e+00> : vector<8x8xf32>
    %151 = tpu.matmul %149, %150, %cst_53 {dimension_numbers = #tpu.dot_dimension_numbers<[1], [0], [0], [1], [0, 0, 1, 1], [], []>} : vector<8x8xbf16>, vector<8x8xbf16>, vector<8x8xf32> -> vector<8x8xf32>
    %152 = vector.broadcast %123 : vector<8x1xf32> to vector<8x8xf32>
    %153 = arith.mulf %151, %152 : vector<8x8xf32>
    %c1_54 = arith.constant 1 : index
    %c0_55 = arith.constant 0 : index
    %c0_56 = arith.constant 0 : index
    %154 = vector.load %arg6[%c1_54, %c0_55, %c0_56] : memref<2x8x32xf32, #tpu.memory_space<vmem>>, vector<1x8x8xf32>
    %155 = vector.shape_cast %154 : vector<1x8x8xf32> to vector<8x8xf32>
    %156 = vector.shape_cast %153 : vector<8x8xf32> to vector<1x8x8xf32>
    tpu.vector_store %arg6[%c1_54, %c0_55, %c0_56], %156 {strides = array<i32>} : memref<2x8x32xf32, #tpu.memory_space<vmem>>, vector<1x8x8xf32>,
    %157 = vector.extract_strided_slice %131 {offsets = [0, 8], sizes = [8, 8], strides = [1, 1]} : vector<8x32xbf16> to vector<8x8xbf16>
    %158 = vector.extract_strided_slice %132 {offsets = [0, 8], sizes = [8, 8], strides = [1, 1]} : vector<8x32xbf16> to vector<8x8xbf16>
    %cst_57 = arith.constant dense<0.000000e+00> : vector<8x8xf32>
    %159 = tpu.matmul %157, %158, %cst_57 {dimension_numbers = #tpu.dot_dimension_numbers<[1], [1], [0], [0], [0, 0, 1, 0], [], []>} : vector<8x8xbf16>, vector<8x8xbf16>, vector<8x8xf32> -> vector<8x8xf32>
    %160 = vector.broadcast %130 : vector<1x8xf32> to vector<8x8xf32>
    %161 = arith.addf %159, %160 : vector<8x8xf32>
    %cst_58 = arith.constant dense<0xFF800000> : vector<8xf32>
    %162 = vector.multi_reduction <maximumf>, %161, %cst_58 [1] : vector<8x8xf32> to vector<8xf32>
    %163 = vector.shape_cast %162 : vector<8xf32> to vector<8x1xf32>
    %164 = vector.broadcast %163 : vector<8x1xf32> to vector<8x8xf32>
    %165 = arith.subf %161, %164 : vector<8x8xf32>
    %166 = math.exp %165 : vector<8x8xf32>
    %cst_59 = arith.constant dense<0.000000e+00> : vector<8xf32>
    %167 = vector.multi_reduction <add>, %166, %cst_59 [1] : vector<8x8xf32> to vector<8xf32>
    %168 = vector.shape_cast %167 : vector<8xf32> to vector<8x1xf32>
    %169 = tpu.reciprocal %168 {approx = true} : vector<8x1xf32> -> vector<8x1xf32>
    %170 = vector.broadcast %169 : vector<8x1xf32> to vector<8x8xf32>
    %171 = arith.mulf %166, %170 : vector<8x8xf32>
    %172 = arith.truncf %171 : vector<8x8xf32> to vector<8x8xbf16>
    %173 = vector.extract_strided_slice %133 {offsets = [0, 8], sizes = [8, 8], strides = [1, 1]} : vector<8x32xbf16> to vector<8x8xbf16>
    %cst_60 = arith.constant dense<0.000000e+00> : vector<8x8xf32>
    %174 = tpu.matmul %172, %173, %cst_60 {dimension_numbers = #tpu.dot_dimension_numbers<[1], [0], [0], [1], [0, 0, 1, 1], [], []>} : vector<8x8xbf16>, vector<8x8xbf16>, vector<8x8xf32> -> vector<8x8xf32>
    %175 = vector.broadcast %123 : vector<8x1xf32> to vector<8x8xf32>
    %176 = arith.mulf %174, %175 : vector<8x8xf32>
    %c1_61 = arith.constant 1 : index
    %c0_62 = arith.constant 0 : index
    %c8_63 = arith.constant 8 : index
    %177 = vector.load %arg6[%c1_61, %c0_62, %c8_63] : memref<2x8x32xf32, #tpu.memory_space<vmem>>, vector<1x8x8xf32>
    %178 = vector.shape_cast %177 : vector<1x8x8xf32> to vector<8x8xf32>
    %179 = vector.shape_cast %176 : vector<8x8xf32> to vector<1x8x8xf32>
    tpu.vector_store %arg6[%c1_61, %c0_62, %c8_63], %179 {strides = array<i32>} : memref<2x8x32xf32, #tpu.memory_space<vmem>>, vector<1x8x8xf32>,
    %180 = vector.extract_strided_slice %131 {offsets = [0, 16], sizes = [8, 8], strides = [1, 1]} : vector<8x32xbf16> to vector<8x8xbf16>
    %181 = vector.extract_strided_slice %132 {offsets = [0, 16], sizes = [8, 8], strides = [1, 1]} : vector<8x32xbf16> to vector<8x8xbf16>
    %cst_64 = arith.constant dense<0.000000e+00> : vector<8x8xf32>
    %182 = tpu.matmul %180, %181, %cst_64 {dimension_numbers = #tpu.dot_dimension_numbers<[1], [1], [0], [0], [0, 0, 1, 0], [], []>} : vector<8x8xbf16>, vector<8x8xbf16>, vector<8x8xf32> -> vector<8x8xf32>
    %183 = vector.broadcast %130 : vector<1x8xf32> to vector<8x8xf32>
    %184 = arith.addf %182, %183 : vector<8x8xf32>
    %cst_65 = arith.constant dense<0xFF800000> : vector<8xf32>
    %185 = vector.multi_reduction <maximumf>, %184, %cst_65 [1] : vector<8x8xf32> to vector<8xf32>
    %186 = vector.shape_cast %185 : vector<8xf32> to vector<8x1xf32>
    %187 = vector.broadcast %186 : vector<8x1xf32> to vector<8x8xf32>
    %188 = arith.subf %184, %187 : vector<8x8xf32>
    %189 = math.exp %188 : vector<8x8xf32>
    %cst_66 = arith.constant dense<0.000000e+00> : vector<8xf32>
    %190 = vector.multi_reduction <add>, %189, %cst_66 [1] : vector<8x8xf32> to vector<8xf32>
    %191 = vector.shape_cast %190 : vector<8xf32> to vector<8x1xf32>
    %192 = tpu.reciprocal %191 {approx = true} : vector<8x1xf32> -> vector<8x1xf32>
    %193 = vector.broadcast %192 : vector<8x1xf32> to vector<8x8xf32>
    %194 = arith.mulf %189, %193 : vector<8x8xf32>
    %195 = arith.truncf %194 : vector<8x8xf32> to vector<8x8xbf16>
    %196 = vector.extract_strided_slice %133 {offsets = [0, 16], sizes = [8, 8], strides = [1, 1]} : vector<8x32xbf16> to vector<8x8xbf16>
    %cst_67 = arith.constant dense<0.000000e+00> : vector<8x8xf32>
    %197 = tpu.matmul %195, %196, %cst_67 {dimension_numbers = #tpu.dot_dimension_numbers<[1], [0], [0], [1], [0, 0, 1, 1], [], []>} : vector<8x8xbf16>, vector<8x8xbf16>, vector<8x8xf32> -> vector<8x8xf32>
    %198 = vector.broadcast %123 : vector<8x1xf32> to vector<8x8xf32>
    %199 = arith.mulf %197, %198 : vector<8x8xf32>
    %c1_68 = arith.constant 1 : index
    %c0_69 = arith.constant 0 : index
    %c16_70 = arith.constant 16 : index
    %200 = vector.load %arg6[%c1_68, %c0_69, %c16_70] : memref<2x8x32xf32, #tpu.memory_space<vmem>>, vector<1x8x8xf32>
    %201 = vector.shape_cast %200 : vector<1x8x8xf32> to vector<8x8xf32>
    %202 = vector.shape_cast %199 : vector<8x8xf32> to vector<1x8x8xf32>
    tpu.vector_store %arg6[%c1_68, %c0_69, %c16_70], %202 {strides = array<i32>} : memref<2x8x32xf32, #tpu.memory_space<vmem>>, vector<1x8x8xf32>,
    %203 = vector.extract_strided_slice %131 {offsets = [0, 24], sizes = [8, 8], strides = [1, 1]} : vector<8x32xbf16> to vector<8x8xbf16>
    %204 = vector.extract_strided_slice %132 {offsets = [0, 24], sizes = [8, 8], strides = [1, 1]} : vector<8x32xbf16> to vector<8x8xbf16>
    %cst_71 = arith.constant dense<0.000000e+00> : vector<8x8xf32>
    %205 = tpu.matmul %203, %204, %cst_71 {dimension_numbers = #tpu.dot_dimension_numbers<[1], [1], [0], [0], [0, 0, 1, 0], [], []>} : vector<8x8xbf16>, vector<8x8xbf16>, vector<8x8xf32> -> vector<8x8xf32>
    %206 = vector.broadcast %130 : vector<1x8xf32> to vector<8x8xf32>
    %207 = arith.addf %205, %206 : vector<8x8xf32>
    %cst_72 = arith.constant dense<0xFF800000> : vector<8xf32>
    %208 = vector.multi_reduction <maximumf>, %207, %cst_72 [1] : vector<8x8xf32> to vector<8xf32>
    %209 = vector.shape_cast %208 : vector<8xf32> to vector<8x1xf32>
    %210 = vector.broadcast %209 : vector<8x1xf32> to vector<8x8xf32>
    %211 = arith.subf %207, %210 : vector<8x8xf32>
    %212 = math.exp %211 : vector<8x8xf32>
    %cst_73 = arith.constant dense<0.000000e+00> : vector<8xf32>
    %213 = vector.multi_reduction <add>, %212, %cst_73 [1] : vector<8x8xf32> to vector<8xf32>
    %214 = vector.shape_cast %213 : vector<8xf32> to vector<8x1xf32>
    %215 = tpu.reciprocal %214 {approx = true} : vector<8x1xf32> -> vector<8x1xf32>
    %216 = vector.broadcast %215 : vector<8x1xf32> to vector<8x8xf32>
    %217 = arith.mulf %212, %216 : vector<8x8xf32>
    %218 = arith.truncf %217 : vector<8x8xf32> to vector<8x8xbf16>
    %219 = vector.extract_strided_slice %133 {offsets = [0, 24], sizes = [8, 8], strides = [1, 1]} : vector<8x32xbf16> to vector<8x8xbf16>
    %cst_74 = arith.constant dense<0.000000e+00> : vector<8x8xf32>
    %220 = tpu.matmul %218, %219, %cst_74 {dimension_numbers = #tpu.dot_dimension_numbers<[1], [0], [0], [1], [0, 0, 1, 1], [], []>} : vector<8x8xbf16>, vector<8x8xbf16>, vector<8x8xf32> -> vector<8x8xf32>
    %221 = vector.broadcast %123 : vector<8x1xf32> to vector<8x8xf32>
    %222 = arith.mulf %220, %221 : vector<8x8xf32>
    %c1_75 = arith.constant 1 : index
    %c0_76 = arith.constant 0 : index
    %c24_77 = arith.constant 24 : index
    %223 = vector.load %arg6[%c1_75, %c0_76, %c24_77] : memref<2x8x32xf32, #tpu.memory_space<vmem>>, vector<1x8x8xf32>
    %224 = vector.shape_cast %223 : vector<1x8x8xf32> to vector<8x8xf32>
    %225 = vector.shape_cast %222 : vector<8x8xf32> to vector<1x8x8xf32>
    tpu.vector_store %arg6[%c1_75, %c0_76, %c24_77], %225 {strides = array<i32>} : memref<2x8x32xf32, #tpu.memory_space<vmem>>, vector<1x8x8xf32>,
    return
  }
  func.func @transform_0(%arg0: i32) -> (i32, i32, i32) {
    %c0_i32 = arith.constant 0 : i32
    %c0_i32_0 = arith.constant 0 : i32
    %c0_i32_1 = arith.constant 0 : i32
    return %arg0, %c0_i32, %c0_i32_0 : i32, i32, i32
  }
  func.func @transform_1(%arg0: i32) -> (i32, i32) {
    %c0_i32 = arith.constant 0 : i32
    %c0_i32_0 = arith.constant 0 : i32
    %c0_i32_1 = arith.constant 0 : i32
    return %c0_i32, %c0_i32_0 : i32, i32
  }
  func.func @transform_2(%arg0: i32) -> (i32, i32) {
    %c0_i32 = arith.constant 0 : i32
    %c0_i32_0 = arith.constant 0 : i32
    %c0_i32_1 = arith.constant 0 : i32
    return %c0_i32, %c0_i32_0 : i32, i32
  }
  func.func @transform_3(%arg0: i32) -> (i32, i32, i32) {
    %c0_i32 = arith.constant 0 : i32
    %c0_i32_0 = arith.constant 0 : i32
    %c0_i32_1 = arith.constant 0 : i32
    return %arg0, %c0_i32, %c0_i32_0 : i32, i32, i32
  }
  func.func @transform_4(%arg0: i32) -> (i32, i32, i32) {
    %c0_i32 = arith.constant 0 : i32
    %c0_i32_0 = arith.constant 0 : i32
    %c0_i32_1 = arith.constant 0 : i32
    return %arg0, %c0_i32, %c0_i32_0 : i32, i32, i32
  }
  func.func @transform_5(%arg0: i32) -> (i32, i32, i32) {
    %c0_i32 = arith.constant 0 : i32
    %c0_i32_0 = arith.constant 0 : i32
    %c0_i32_1 = arith.constant 0 : i32
    return %arg0, %c0_i32, %c0_i32_0 : i32, i32, i32
  }
}

</mosaic_0001>

<llo_original>
// kernel: tpu_custom_call.1
$region0: #{tpu_custom_call.1}
  #allocation0 [shape = 'u32[]', space=smem, size = 0x4, offset = 0x4, fixed_abs, tag = 'smem constant byte address 0x4 - core index']
  #allocation1 [shape = 'u32[144,128]{1,0:T(1,128)}', space=vmem, size = 0x12000, scoped, tag = 'internal scratch']
  %s0 = inlined_call_operand.hbm [shape: bf16[2,8,32], index: 0, kind: input, shape index: {}]
  %s1 = inlined_call_operand.vmem [shape: bf16[32,96], index: 1, kind: input, shape index: {}]
  %s2 = inlined_call_operand.vmem [shape: f32[1,96], index: 2, kind: input, shape index: {}]
  %s3 = inlined_call_operand.vmem [shape: f32[2,8,1], index: 3, kind: input, shape index: {}]
  %s4 = inlined_call_operand.vmem [shape: f32[2,1,8], index: 4, kind: input, shape index: {}]
  %s5 = inlined_call_operand.hbm [shape: f32[2,8,32], index: 5, kind: output, shape index: {}]
  %s6 = sld [smem:[#allocation0]]
  $region34: #{tpu_custom_call.1} parent=0
    _
  %s8 = ssub.s32 1, %s6
  %s9 = scalar_select 0, %s8, %s6
  $region1: #{tpu_custom_call.1} parent=0
    #allocation2 [shape = 'u8[4096]{0}', space=vmem, size = 0x1000, scoped, tag = 'input window, operand 0, single buffered']
    #allocation3 [shape = 's32[1]{0}', space=sflag, size = 0x4, scoped, tag = 'scoped memory for tpu_custom_call.1']
    #allocation4 [shape = 's32[1]{0}', space=sflag, size = 0x4, scoped, tag = 'scoped memory for tpu_custom_call.1']
    #allocation5 [shape = 'u8[8192]{0}', space=vmem, size = 0x2000, scoped, tag = 'output window, operand 0, single buffered']
    %10 = vsyncpa [#allocation3], 0
    %11 = vsyncpa [#allocation4], 0
    // Predicated region
    $region2: #{tpu_custom_call.1} parent=1 // pred_check
      _
    $region3: #{tpu_custom_call.1} parent=1 // pred_check_branch
      %13 = sbr.rel (0) target = $region5
    $region4: #{tpu_custom_call.1} parent=1 // pred_region
      %s15 = ssub.s32 128, 128
      %16 = vsyncadd [#allocation3], %s15
      %s17 = sshll.u32 [#allocation2], 4
      %s18 = int_to_ptr.vmem [resolvable:$true] %s17
      %23 = dma.hbm_to_vmem [thread:$0]  %s0, 128, %s18, [#allocation3], 64, 64, 4
    $region5: #{tpu_custom_call.1} parent=1 // pred_fallthru
      _
    // Predicated region
    $region6: #{tpu_custom_call.1} parent=1 // pred_check
      _
    $region7: #{tpu_custom_call.1} parent=1 // pred_check_branch
      %25 = sbr.rel (0) target = $region9
    $region8: #{tpu_custom_call.1} parent=1 // pred_region
      _
    $region9: #{tpu_custom_call.1} parent=1 // pred_fallthru
      _
    // Predicated region
    $region10: #{tpu_custom_call.1} parent=1 // pred_check
      _
    $region11: #{tpu_custom_call.1} parent=1 // pred_check_branch
      %27 = sbr.rel (0) target = $region13
    $region12: #{tpu_custom_call.1} parent=1 // pred_region
      _
    $region13: #{tpu_custom_call.1} parent=1 // pred_fallthru
      _
    // Predicated region
    $region14: #{tpu_custom_call.1} parent=1 // pred_check
      _
    $region15: #{tpu_custom_call.1} parent=1 // pred_check_branch
      %29 = sbr.rel (0) target = $region17
    $region16: #{tpu_custom_call.1} parent=1 // pred_region
      _
    $region17: #{tpu_custom_call.1} parent=1 // pred_fallthru
      _
    // Predicated region
    $region18: #{tpu_custom_call.1} parent=1 // pred_check
      _
    $region19: #{tpu_custom_call.1} parent=1 // pred_check_branch
      %31 = sbr.rel (0) target = $region21
    $region20: #{tpu_custom_call.1} parent=1 // pred_region
      _
    $region21: #{tpu_custom_call.1} parent=1 // pred_fallthru
      _
    // Predicated region
    $region22: #{tpu_custom_call.1} parent=1 // pred_check
      _
    $region23: #{tpu_custom_call.1} parent=1 // pred_check_branch
      %33 = sbr.rel (0) target = $region25
    $region24: #{tpu_custom_call.1} parent=1 // pred_region
      %34 = dma.done [#allocation3], 128
    $region25: #{tpu_custom_call.1} parent=1 // pred_fallthru
      _
    %v36 = vld [vmem:[#allocation2] sm:$0xf]
    %v37 = vld [vmem:[#allocation2 + $0x4] sm:$0xf]
    %v38 = vld [vmem:[%s1] sm:$0xf]
    %v39 = vld [vmem:[%s1 + $0x4] sm:$0xf]
    %v40 = vld [vmem:[%s1 + $0x8] sm:$0xf]
    %v41 = vld [vmem:[%s1 + $0xc] sm:$0xf]
    %v42 = vld [vmem:[%s2] sm:$0x1]
    %v44 = vlaneseq
    %v45 = vshrl.u32 %v44, 7
    %v46 = vsub.s32 0, %v45
    %v47 = vrot.slane %v42, %v46
    %v51 = vunpack.c.l.b16 %v36
    %v52 = vunpack.c.l.b16 %v37
    %v53 = vpack.c.b16 %v52, %v51
    %v58 = vunpack.c.l.b16 %v38
    %v59 = vunpack.c.l.b16 %v39
    %v60 = vunpack.c.l.b16 %v40
    %v61 = vunpack.c.l.b16 %v41
    %v62 = vpack.c.b16 %v59, %v58
    %v63 = vpack.c.b16 %v61, %v60
    %vm66 = vcmask 261120
    %v68 = vsel %vm66, %v53, 0
    %70 = vmatprep.subr.bf16.mxu0 0
    %71 = vmatpush1.bf16.msra.mxu0 0
    %72 = vmatprep.subr.bf16.mxu0 0
    %73 = vmatpush1.bf16.msra.mxu0 0
    %74 = vmatprep.subr.bf16.mxu0 0
    %75 = vmatpush1.bf16.msra.mxu0 0
    %76 = vmatprep.subr.bf16.mxu0 0
    %77 = vmatpush1.bf16.msra.mxu0 0
    %78 = vmatprep.subr.bf16.mxu0 0
    %79 = vmatpush1.bf16.msra.mxu0 0
    %80 = vmatprep.subr.bf16.mxu0 0
    %81 = vmatpush1.bf16.msra.mxu0 0
    %82 = vmatprep.subr.bf16.mxu0 0
    %83 = vmatpush1.bf16.msra.mxu0 %v63
    %84 = vmatprep.subr.bf16.mxu0 0
    %85 = vmatpush1.bf16.msra.mxu0 %v62
    %86 = vmatprep.subr.bf16.mxu0 0
    %87 = vmatpush2.bf16.msra.mxu0 0
    %88 = vmatprep.subr.bf16.mxu0 0
    %89 = vmatpush2.bf16.msra.mxu0 0
    %90 = vmatprep.subr.bf16.mxu0 0
    %91 = vmatpush2.bf16.msra.mxu0 0
    %92 = vmatprep.subr.bf16.mxu0 0
    %93 = vmatpush2.bf16.msra.mxu0 0
    %94 = vmatprep.subr.bf16.mxu0 0
    %95 = vmatpush2.bf16.msra.mxu0 0
    %96 = vmatprep.subr.bf16.mxu0 0
    %97 = vmatpush2.bf16.msra.mxu0 0
    %98 = vmatprep.subr.bf16.mxu0 0
    %99 = vmatpush2.bf16.msra.mxu0 0
    %100 = vmatprep.subr.bf16.mxu0 0
    %101 = vmatpush2.bf16.msra.mxu0 0
    %102 = vmatprep.mubr.bf16.mxu0 0
    %103 = vmatmul.mubr.bf16.gmra.mxu0 %v68
    %v104 = vpop.f32.mrf.mxu0
    %v105 = vadd.f32 %v47, %v104
    %v106 = vpop.f32.mrf.mxu0
    %v107 = vpop.f32.mrf.mxu0
    %v108 = vadd.f32 %v47, %v107
    %v109 = vpop.f32.mrf.mxu0
    %110 = vdwg.mxu0
    %v111 = vmul.f32 %v105, 0.2
    %v112 = vmul.f32 %v108, 0.2
    %v113 = vmax.f32 %v105, %v111
    %v114 = vmax.f32 %v108, %v112
    %v115 = vmul.f32 %v113, 0.35355338
    %v116 = vmul.f32 %v114, 0.35355338
    %v117 = vpack.c.bf16 %v116, %v115
    %v118 = vpack.c.bf16 %v114, %v113
    %v119 = vld [vmem:[%s3] sm:$0xff]
    %v120 = vld [vmem:[%s4] sm:$0x1]
    %vm121 = vcmp.ne.f32.partialorder %v120, 0.0
    %v122 = vsel %vm121, 0.0, -4.2949673e+09
    %v124 = vlaneseq
    %v125 = vshrl.u32 %v124, 7
    %v126 = vsub.s32 0, %v125
    %v127 = vrot.slane %v122, %v126
    %130 = vrot.lane.b32.xlu0 %v118, 96
    %v131 = vpop.permute.xlu0 %130
    %vm132 = vcmask 64512
    %v134 = vsel %vm132, %v117, 0
    %v137 = vsel %vm132, %v131, 0
    %139 = vmatprep.subr.bf16.mxu0 0
    %140 = vmatpush1.bf16.xpose.msra.mxu0 0
    %141 = vmatprep.subr.bf16.mxu0 0
    %142 = vmatpush1.bf16.xpose.msra.mxu0 0
    %143 = vmatprep.subr.bf16.mxu0 0
    %144 = vmatpush1.bf16.xpose.msra.mxu0 0
    %145 = vmatprep.subr.bf16.mxu0 0
    %146 = vmatpush1.bf16.xpose.msra.mxu0 0
    %147 = vmatprep.subr.bf16.mxu0 0
    %148 = vmatpush1.bf16.xpose.msra.mxu0 0
    %149 = vmatprep.subr.bf16.mxu0 0
    %150 = vmatpush1.bf16.xpose.msra.mxu0 0
    %151 = vmatprep.subr.bf16.mxu0 0
    %152 = vmatpush1.bf16.xpose.msra.mxu0 0
    %153 = vmatprep.subr.bf16.mxu0 0
    %154 = vmatpush1.bf16.xpose.msra.mxu0 %v137
    %155 = vmatprep.subr.bf16.mxu0 0
    %156 = vmatpush2.bf16.xpose.msra.mxu0 0
    %157 = vmatprep.subr.bf16.mxu0 0
    %158 = vmatpush2.bf16.xpose.msra.mxu0 0
    %159 = vmatprep.subr.bf16.mxu0 0
    %160 = vmatpush2.bf16.xpose.msra.mxu0 0
    %161 = vmatprep.subr.bf16.mxu0 0
    %162 = vmatpush2.bf16.xpose.msra.mxu0 0
    %163 = vmatprep.subr.bf16.mxu0 0
    %164 = vmatpush2.bf16.xpose.msra.mxu0 0
    %165 = vmatprep.subr.bf16.mxu0 0
    %166 = vmatpush2.bf16.xpose.msra.mxu0 0
    %167 = vmatprep.subr.bf16.mxu0 0
    %168 = vmatpush2.bf16.xpose.msra.mxu0 0
    %169 = vmatprep.subr.bf16.mxu0 0
    %170 = vmatpush2.bf16.xpose.msra.mxu0 0
    %171 = vmatprep.mubr.bf16.mxu0 0
    %172 = vmatmul.mubr.bf16.gmra.mxu0 %v134
    %v173 = vpop.f32.mrf.mxu0
    %v174 = vadd.f32 %v127, %v173
    %v175 = vpop.f32.mrf.mxu0
    %v176 = vpop.f32.mrf.mxu0
    %v177 = vpop.f32.mrf.mxu0
    %178 = vdwg.mxu0
    %v179 = vsel %vm132, %v174, -inf
    %180 = vmax.xlane.f32.xlu0 %v179
    %v181 = vpop.xlane.xlu0 %180
    %v182 = vsub.f32 %v174, %v181
    %v183 = vmul.f32 %v182, 1.442695
    %v184 = vpow.pop %v183
    %v185 = vsel %vm132, %v184, 0.0
    %186 = vadd.xlane.f32.xlu0 %v185
    %v187 = vpop.xlane.xlu0 %186
    %v188 = vrcp.pop %v187
    %v189 = vmul.f32 %v184, %v188
    %v190 = vpack.c.bf16 %v189, %v189
    %191 = vrot.lane.b32.xlu0 %v118, 64
    %v192 = vpop.permute.xlu0 %191
    %v194 = vsel %vm132, %v190, 0
    %vm196 = vcmask 1043456
    %v198 = vsel %vm196, %v192, 0
    %200 = vmatprep.subr.bf16.mxu0 0
    %201 = vmatpush1.bf16.msra.mxu0 0
    %202 = vmatprep.subr.bf16.mxu0 0
    %203 = vmatpush1.bf16.msra.mxu0 0
    %204 = vmatprep.subr.bf16.mxu0 0
    %205 = vmatpush1.bf16.msra.mxu0 0
    %206 = vmatprep.subr.bf16.mxu0 0
    %207 = vmatpush1.bf16.msra.mxu0 0
    %208 = vmatprep.subr.bf16.mxu0 0
    %209 = vmatpush1.bf16.msra.mxu0 0
    %210 = vmatprep.subr.bf16.mxu0 0
    %211 = vmatpush1.bf16.msra.mxu0 0
    %212 = vmatprep.subr.bf16.mxu0 0
    %213 = vmatpush1.bf16.msra.mxu0 0
    %214 = vmatprep.subr.bf16.mxu0 0
    %215 = vmatpush1.bf16.msra.mxu0 %v198
    %216 = vmatprep.subr.bf16.mxu0 0
    %217 = vmatpush2.bf16.msra.mxu0 0
    %218 = vmatprep.subr.bf16.mxu0 0
    %219 = vmatpush2.bf16.msra.mxu0 0
    %220 = vmatprep.subr.bf16.mxu0 0
    %221 = vmatpush2.bf16.msra.mxu0 0
    %222 = vmatprep.subr.bf16.mxu0 0
    %223 = vmatpush2.bf16.msra.mxu0 0
    %224 = vmatprep.subr.bf16.mxu0 0
    %225 = vmatpush2.bf16.msra.mxu0 0
    %226 = vmatprep.subr.bf16.mxu0 0
    %227 = vmatpush2.bf16.msra.mxu0 0
    %228 = vmatprep.subr.bf16.mxu0 0
    %229 = vmatpush2.bf16.msra.mxu0 0
    %230 = vmatprep.subr.bf16.mxu0 0
    %231 = vmatpush2.bf16.msra.mxu0 0
    %232 = vmatprep.mubr.bf16.mxu0 0
    %233 = vmatmul.mubr.bf16.gmra.mxu0 %v194
    %v234 = vpop.f32.mrf.mxu0
    %v235 = vadd.f32 0.0, %v234
    %v236 = vpop.f32.mrf.mxu0
    %v237 = vpop.f32.mrf.mxu0
    %v238 = vpop.f32.mrf.mxu0
    %239 = vdwg.mxu0
    %241 = vset.pattern.permute.xlu0 0
    %242 = vperm.xlu0 %241, %v119
    %v243 = vpop.permute.xlu0 %242
    %v245 = vmul.f32 %v235, %v243
    %246 = vst.msk [vmem:[#allocation5] sm:$0xff] %vm132, %v245
    %248 = vrot.lane.b32.xlu0 %v117, 120
    %v249 = vpop.permute.xlu0 %248
    %250 = vrot.lane.b32.xlu0 %v118, 88
    %v251 = vpop.permute.xlu0 %250
    %v253 = vsel %vm132, %v249, 0
    %v256 = vsel %vm132, %v251, 0
    %258 = vmatprep.subr.bf16.mxu0 0
    %259 = vmatpush1.bf16.xpose.msra.mxu0 0
    %260 = vmatprep.subr.bf16.mxu0 0
    %261 = vmatpush1.bf16.xpose.msra.mxu0 0
    %262 = vmatprep.subr.bf16.mxu0 0
    %263 = vmatpush1.bf16.xpose.msra.mxu0 0
    %264 = vmatprep.subr.bf16.mxu0 0
    %265 = vmatpush1.bf16.xpose.msra.mxu0 0
    %266 = vmatprep.subr.bf16.mxu0 0
    %267 = vmatpush1.bf16.xpose.msra.mxu0 0
    %268 = vmatprep.subr.bf16.mxu0 0
    %269 = vmatpush1.bf16.xpose.msra.mxu0 0
    %270 = vmatprep.subr.bf16.mxu0 0
    %271 = vmatpush1.bf16.xpose.msra.mxu0 0
    %272 = vmatprep.subr.bf16.mxu0 0
    %273 = vmatpush1.bf16.xpose.msra.mxu0 %v256
    %274 = vmatprep.subr.bf16.mxu0 0
    %275 = vmatpush2.bf16.xpose.msra.mxu0 0
    %276 = vmatprep.subr.bf16.mxu0 0
    %277 = vmatpush2.bf16.xpose.msra.mxu0 0
    %278 = vmatprep.subr.bf16.mxu0 0
    %279 = vmatpush2.bf16.xpose.msra.mxu0 0
    %280 = vmatprep.subr.bf16.mxu0 0
    %281 = vmatpush2.bf16.xpose.msra.mxu0 0
    %282 = vmatprep.subr.bf16.mxu0 0
    %283 = vmatpush2.bf16.xpose.msra.mxu0 0
    %284 = vmatprep.subr.bf16.mxu0 0
    %285 = vmatpush2.bf16.xpose.msra.mxu0 0
    %286 = vmatprep.subr.bf16.mxu0 0
    %287 = vmatpush2.bf16.xpose.msra.mxu0 0
    %288 = vmatprep.subr.bf16.mxu0 0
    %289 = vmatpush2.bf16.xpose.msra.mxu0 0
    %290 = vmatprep.mubr.bf16.mxu0 0
    %291 = vmatmul.mubr.bf16.gmra.mxu0 %v253
    %v292 = vpop.f32.mrf.mxu0
    %v293 = vadd.f32 %v127, %v292
    %v294 = vpop.f32.mrf.mxu0
    %v295 = vpop.f32.mrf.mxu0
    %v296 = vpop.f32.mrf.mxu0
    %297 = vdwg.mxu0
    %v298 = vsel %vm132, %v293, -inf
    %299 = vmax.xlane.f32.xlu0 %v298
    %v300 = vpop.xlane.xlu0 %299
    %v301 = vsub.f32 %v293, %v300
    %v302 = vmul.f32 %v301, 1.442695
    %v303 = vpow.pop %v302
    %v304 = vsel %vm132, %v303, 0.0
    %305 = vadd.xlane.f32.xlu0 %v304
    %v306 = vpop.xlane.xlu0 %305
    %v307 = vrcp.pop %v306
    %v308 = vmul.f32 %v303, %v307
    %v309 = vpack.c.bf16 %v308, %v308
    %310 = vrot.lane.b32.xlu0 %v118, 56
    %v311 = vpop.permute.xlu0 %310
    %v313 = vsel %vm132, %v309, 0
    %v316 = vsel %vm196, %v311, 0
    %318 = vmatprep.subr.bf16.mxu0 0
    %319 = vmatpush1.bf16.msra.mxu0 0
    %320 = vmatprep.subr.bf16.mxu0 0
    %321 = vmatpush1.bf16.msra.mxu0 0
    %322 = vmatprep.subr.bf16.mxu0 0
    %323 = vmatpush1.bf16.msra.mxu0 0
    %324 = vmatprep.subr.bf16.mxu0 0
    %325 = vmatpush1.bf16.msra.mxu0 0
    %326 = vmatprep.subr.bf16.mxu0 0
    %327 = vmatpush1.bf16.msra.mxu0 0
    %328 = vmatprep.subr.bf16.mxu0 0
    %329 = vmatpush1.bf16.msra.mxu0 0
    %330 = vmatprep.subr.bf16.mxu0 0
    %331 = vmatpush1.bf16.msra.mxu0 0
    %332 = vmatprep.subr.bf16.mxu0 0
    %333 = vmatpush1.bf16.msra.mxu0 %v316
    %334 = vmatprep.subr.bf16.mxu0 0
    %335 = vmatpush2.bf16.msra.mxu0 0
    %336 = vmatprep.subr.bf16.mxu0 0
    %337 = vmatpush2.bf16.msra.mxu0 0
    %338 = vmatprep.subr.bf16.mxu0 0
    %339 = vmatpush2.bf16.msra.mxu0 0
    %340 = vmatprep.subr.bf16.mxu0 0
    %341 = vmatpush2.bf16.msra.mxu0 0
    %342 = vmatprep.subr.bf16.mxu0 0
    %343 = vmatpush2.bf16.msra.mxu0 0
    %344 = vmatprep.subr.bf16.mxu0 0
    %345 = vmatpush2.bf16.msra.mxu0 0
    %346 = vmatprep.subr.bf16.mxu0 0
    %347 = vmatpush2.bf16.msra.mxu0 0
    %348 = vmatprep.subr.bf16.mxu0 0
    %349 = vmatpush2.bf16.msra.mxu0 0
    %350 = vmatprep.mubr.bf16.mxu0 0
    %351 = vmatmul.mubr.bf16.gmra.mxu0 %v313
    %v352 = vpop.f32.mrf.mxu0
    %v353 = vadd.f32 0.0, %v352
    %v354 = vpop.f32.mrf.mxu0
    %v355 = vpop.f32.mrf.mxu0
    %v356 = vpop.f32.mrf.mxu0
    %357 = vdwg.mxu0
    %v358 = vmul.f32 %v353, %v243
    %360 = vrot.lane.b32.xlu0 %v358, 8
    %v361 = vpop.permute.xlu0 %360
    %vm363 = vcmask 130112
    %364 = vst.msk [vmem:[#allocation5] sm:$0xff] %vm363, %v361
    %365 = vrot.lane.b32.xlu0 %v117, 112
    %v366 = vpop.permute.xlu0 %365
    %367 = vrot.lane.b32.xlu0 %v118, 80
    %v368 = vpop.permute.xlu0 %367
    %v370 = vsel %vm132, %v366, 0
    %v373 = vsel %vm132, %v368, 0
    %375 = vmatprep.subr.bf16.mxu0 0
    %376 = vmatpush1.bf16.xpose.msra.mxu0 0
    %377 = vmatprep.subr.bf16.mxu0 0
    %378 = vmatpush1.bf16.xpose.msra.mxu0 0
    %379 = vmatprep.subr.bf16.mxu0 0
    %380 = vmatpush1.bf16.xpose.msra.mxu0 0
    %381 = vmatprep.subr.bf16.mxu0 0
    %382 = vmatpush1.bf16.xpose.msra.mxu0 0
    %383 = vmatprep.subr.bf16.mxu0 0
    %384 = vmatpush1.bf16.xpose.msra.mxu0 0
    %385 = vmatprep.subr.bf16.mxu0 0
    %386 = vmatpush1.bf16.xpose.msra.mxu0 0
    %387 = vmatprep.subr.bf16.mxu0 0
    %388 = vmatpush1.bf16.xpose.msra.mxu0 0
    %389 = vmatprep.subr.bf16.mxu0 0
    %390 = vmatpush1.bf16.xpose.msra.mxu0 %v373
    %391 = vmatprep.subr.bf16.mxu0 0
    %392 = vmatpush2.bf16.xpose.msra.mxu0 0
    %393 = vmatprep.subr.bf16.mxu0 0
    %394 = vmatpush2.bf16.xpose.msra.mxu0 0
    %395 = vmatprep.subr.bf16.mxu0 0
    %396 = vmatpush2.bf16.xpose.msra.mxu0 0
    %397 = vmatprep.subr.bf16.mxu0 0
    %398 = vmatpush2.bf16.xpose.msra.mxu0 0
    %399 = vmatprep.subr.bf16.mxu0 0
    %400 = vmatpush2.bf16.xpose.msra.mxu0 0
    %401 = vmatprep.subr.bf16.mxu0 0
    %402 = vmatpush2.bf16.xpose.msra.mxu0 0
    %403 = vmatprep.subr.bf16.mxu0 0
    %404 = vmatpush2.bf16.xpose.msra.mxu0 0
    %405 = vmatprep.subr.bf16.mxu0 0
    %406 = vmatpush2.bf16.xpose.msra.mxu0 0
    %407 = vmatprep.mubr.bf16.mxu0 0
    %408 = vmatmul.mubr.bf16.gmra.mxu0 %v370
    %v409 = vpop.f32.mrf.mxu0
    %v410 = vadd.f32 %v127, %v409
    %v411 = vpop.f32.mrf.mxu0
    %v412 = vpop.f32.mrf.mxu0
    %v413 = vpop.f32.mrf.mxu0
    %414 = vdwg.mxu0
    %v415 = vsel %vm132, %v410, -inf
    %416 = vmax.xlane.f32.xlu0 %v415
    %v417 = vpop.xlane.xlu0 %416
    %v418 = vsub.f32 %v410, %v417
    %v419 = vmul.f32 %v418, 1.442695
    %v420 = vpow.pop %v419
    %v421 = vsel %vm132, %v420, 0.0
    %422 = vadd.xlane.f32.xlu0 %v421
    %v423 = vpop.xlane.xlu0 %422
    %v424 = vrcp.pop %v423
    %v425 = vmul.f32 %v420, %v424
    %v426 = vpack.c.bf16 %v425, %v425
    %427 = vrot.lane.b32.xlu0 %v118, 48
    %v428 = vpop.permute.xlu0 %427
    %v430 = vsel %vm132, %v426, 0
    %v433 = vsel %vm196, %v428, 0
    %435 = vmatprep.subr.bf16.mxu0 0
    %436 = vmatpush1.bf16.msra.mxu0 0
    %437 = vmatprep.subr.bf16.mxu0 0
    %438 = vmatpush1.bf16.msra.mxu0 0
    %439 = vmatprep.subr.bf16.mxu0 0
    %440 = vmatpush1.bf16.msra.mxu0 0
    %441 = vmatprep.subr.bf16.mxu0 0
    %442 = vmatpush1.bf16.msra.mxu0 0
    %443 = vmatprep.subr.bf16.mxu0 0
    %444 = vmatpush1.bf16.msra.mxu0 0
    %445 = vmatprep.subr.bf16.mxu0 0
    %446 = vmatpush1.bf16.msra.mxu0 0
    %447 = vmatprep.subr.bf16.mxu0 0
    %448 = vmatpush1.bf16.msra.mxu0 0
    %449 = vmatprep.subr.bf16.mxu0 0
    %450 = vmatpush1.bf16.msra.mxu0 %v433
    %451 = vmatprep.subr.bf16.mxu0 0
    %452 = vmatpush2.bf16.msra.mxu0 0
    %453 = vmatprep.subr.bf16.mxu0 0
    %454 = vmatpush2.bf16.msra.mxu0 0
    %455 = vmatprep.subr.bf16.mxu0 0
    %456 = vmatpush2.bf16.msra.mxu0 0
    %457 = vmatprep.subr.bf16.mxu0 0
    %458 = vmatpush2.bf16.msra.mxu0 0
    %459 = vmatprep.subr.bf16.mxu0 0
    %460 = vmatpush2.bf16.msra.mxu0 0
    %461 = vmatprep.subr.bf16.mxu0 0
    %462 = vmatpush2.bf16.msra.mxu0 0
    %463 = vmatprep.subr.bf16.mxu0 0
    %464 = vmatpush2.bf16.msra.mxu0 0
    %465 = vmatprep.subr.bf16.mxu0 0
    %466 = vmatpush2.bf16.msra.mxu0 0
    %467 = vmatprep.mubr.bf16.mxu0 0
    %468 = vmatmul.mubr.bf16.gmra.mxu0 %v430
    %v469 = vpop.f32.mrf.mxu0
    %v470 = vadd.f32 0.0, %v469
    %v471 = vpop.f32.mrf.mxu0
    %v472 = vpop.f32.mrf.mxu0
    %v473 = vpop.f32.mrf.mxu0
    %474 = vdwg.mxu0
    %v475 = vmul.f32 %v470, %v243
    %477 = vrot.lane.b32.xlu0 %v475, 16
    %v478 = vpop.permute.xlu0 %477
    %vm480 = vcmask 195712
    %481 = vst.msk [vmem:[#allocation5] sm:$0xff] %vm480, %v478
    %482 = vrot.lane.b32.xlu0 %v117, 104
    %v483 = vpop.permute.xlu0 %482
    %484 = vrot.lane.b32.xlu0 %v118, 72
    %v485 = vpop.permute.xlu0 %484
    %v487 = vsel %vm132, %v483, 0
    %v490 = vsel %vm132, %v485, 0
    %492 = vmatprep.subr.bf16.mxu0 0
    %493 = vmatpush1.bf16.xpose.msra.mxu0 0
    %494 = vmatprep.subr.bf16.mxu0 0
    %495 = vmatpush1.bf16.xpose.msra.mxu0 0
    %496 = vmatprep.subr.bf16.mxu0 0
    %497 = vmatpush1.bf16.xpose.msra.mxu0 0
    %498 = vmatprep.subr.bf16.mxu0 0
    %499 = vmatpush1.bf16.xpose.msra.mxu0 0
    %500 = vmatprep.subr.bf16.mxu0 0
    %501 = vmatpush1.bf16.xpose.msra.mxu0 0
    %502 = vmatprep.subr.bf16.mxu0 0
    %503 = vmatpush1.bf16.xpose.msra.mxu0 0
    %504 = vmatprep.subr.bf16.mxu0 0
    %505 = vmatpush1.bf16.xpose.msra.mxu0 0
    %506 = vmatprep.subr.bf16.mxu0 0
    %507 = vmatpush1.bf16.xpose.msra.mxu0 %v490
    %508 = vmatprep.subr.bf16.mxu0 0
    %509 = vmatpush2.bf16.xpose.msra.mxu0 0
    %510 = vmatprep.subr.bf16.mxu0 0
    %511 = vmatpush2.bf16.xpose.msra.mxu0 0
    %512 = vmatprep.subr.bf16.mxu0 0
    %513 = vmatpush2.bf16.xpose.msra.mxu0 0
    %514 = vmatprep.subr.bf16.mxu0 0
    %515 = vmatpush2.bf16.xpose.msra.mxu0 0
    %516 = vmatprep.subr.bf16.mxu0 0
    %517 = vmatpush2.bf16.xpose.msra.mxu0 0
    %518 = vmatprep.subr.bf16.mxu0 0
    %519 = vmatpush2.bf16.xpose.msra.mxu0 0
    %520 = vmatprep.subr.bf16.mxu0 0
    %521 = vmatpush2.bf16.xpose.msra.mxu0 0
    %522 = vmatprep.subr.bf16.mxu0 0
    %523 = vmatpush2.bf16.xpose.msra.mxu0 0
    %524 = vmatprep.mubr.bf16.mxu0 0
    %525 = vmatmul.mubr.bf16.gmra.mxu0 %v487
    %v526 = vpop.f32.mrf.mxu0
    %v527 = vadd.f32 %v127, %v526
    %v528 = vpop.f32.mrf.mxu0
    %v529 = vpop.f32.mrf.mxu0
    %v530 = vpop.f32.mrf.mxu0
    %531 = vdwg.mxu0
    %v532 = vsel %vm132, %v527, -inf
    %533 = vmax.xlane.f32.xlu0 %v532
    %v534 = vpop.xlane.xlu0 %533
    %v535 = vsub.f32 %v527, %v534
    %v536 = vmul.f32 %v535, 1.442695
    %v537 = vpow.pop %v536
    %v538 = vsel %vm132, %v537, 0.0
    %539 = vadd.xlane.f32.xlu0 %v538
    %v540 = vpop.xlane.xlu0 %539
    %v541 = vrcp.pop %v540
    %v542 = vmul.f32 %v537, %v541
    %v543 = vpack.c.bf16 %v542, %v542
    %544 = vrot.lane.b32.xlu0 %v118, 40
    %v545 = vpop.permute.xlu0 %544
    %v547 = vsel %vm132, %v543, 0
    %v550 = vsel %vm196, %v545, 0
    %552 = vmatprep.subr.bf16.mxu0 0
    %553 = vmatpush1.bf16.msra.mxu0 0
    %554 = vmatprep.subr.bf16.mxu0 0
    %555 = vmatpush1.bf16.msra.mxu0 0
    %556 = vmatprep.subr.bf16.mxu0 0
    %557 = vmatpush1.bf16.msra.mxu0 0
    %558 = vmatprep.subr.bf16.mxu0 0
    %559 = vmatpush1.bf16.msra.mxu0 0
    %560 = vmatprep.subr.bf16.mxu0 0
    %561 = vmatpush1.bf16.msra.mxu0 0
    %562 = vmatprep.subr.bf16.mxu0 0
    %563 = vmatpush1.bf16.msra.mxu0 0
    %564 = vmatprep.subr.bf16.mxu0 0
    %565 = vmatpush1.bf16.msra.mxu0 0
    %566 = vmatprep.subr.bf16.mxu0 0
    %567 = vmatpush1.bf16.msra.mxu0 %v550
    %568 = vmatprep.subr.bf16.mxu0 0
    %569 = vmatpush2.bf16.msra.mxu0 0
    %570 = vmatprep.subr.bf16.mxu0 0
    %571 = vmatpush2.bf16.msra.mxu0 0
    %572 = vmatprep.subr.bf16.mxu0 0
    %573 = vmatpush2.bf16.msra.mxu0 0
    %574 = vmatprep.subr.bf16.mxu0 0
    %575 = vmatpush2.bf16.msra.mxu0 0
    %576 = vmatprep.subr.bf16.mxu0 0
    %577 = vmatpush2.bf16.msra.mxu0 0
    %578 = vmatprep.subr.bf16.mxu0 0
    %579 = vmatpush2.bf16.msra.mxu0 0
    %580 = vmatprep.subr.bf16.mxu0 0
    %581 = vmatpush2.bf16.msra.mxu0 0
    %582 = vmatprep.subr.bf16.mxu0 0
    %583 = vmatpush2.bf16.msra.mxu0 0
    %584 = vmatprep.mubr.bf16.mxu0 0
    %585 = vmatmul.mubr.bf16.gmra.mxu0 %v547
    %v586 = vpop.f32.mrf.mxu0
    %v587 = vadd.f32 0.0, %v586
    %v588 = vpop.f32.mrf.mxu0
    %v589 = vpop.f32.mrf.mxu0
    %v590 = vpop.f32.mrf.mxu0
    %591 = vdwg.mxu0
    %v592 = vmul.f32 %v587, %v243
    %594 = vrot.lane.b32.xlu0 %v592, 24
    %v595 = vpop.permute.xlu0 %594
    %vm597 = vcmask 261312
    %598 = vst.msk [vmem:[#allocation5] sm:$0xff] %vm597, %v595
    %s599 = scalar_lea.vmem %s3, 8
    %v600 = vld [vmem:[%s599] sm:$0xff]
    %s601 = scalar_lea.vmem %s4, 1
    %v602 = vld [vmem:[%s601] sm:$0x1]
    %vm603 = vcmp.ne.f32.partialorder %v602, 0.0
    %v604 = vsel %vm603, 0.0, -4.2949673e+09
    %v606 = vlaneseq
    %v607 = vshrl.u32 %v606, 7
    %v608 = vsub.s32 0, %v607
    %v609 = vrot.slane %v604, %v608
    %v611 = vrot.slane %v117, 4
    %v612 = vrot.slane %v118, 4
    %613 = vrot.lane.b32.xlu0 %v612, 96
    %v614 = vpop.permute.xlu0 %613
    %v616 = vsel %vm132, %v611, 0
    %v619 = vsel %vm132, %v614, 0
    %621 = vmatprep.subr.bf16.mxu0 0
    %622 = vmatpush1.bf16.xpose.msra.mxu0 0
    %623 = vmatprep.subr.bf16.mxu0 0
    %624 = vmatpush1.bf16.xpose.msra.mxu0 0
    %625 = vmatprep.subr.bf16.mxu0 0
    %626 = vmatpush1.bf16.xpose.msra.mxu0 0
    %627 = vmatprep.subr.bf16.mxu0 0
    %628 = vmatpush1.bf16.xpose.msra.mxu0 0
    %629 = vmatprep.subr.bf16.mxu0 0
    %630 = vmatpush1.bf16.xpose.msra.mxu0 0
    %631 = vmatprep.subr.bf16.mxu0 0
    %632 = vmatpush1.bf16.xpose.msra.mxu0 0
    %633 = vmatprep.subr.bf16.mxu0 0
    %634 = vmatpush1.bf16.xpose.msra.mxu0 0
    %635 = vmatprep.subr.bf16.mxu0 0
    %636 = vmatpush1.bf16.xpose.msra.mxu0 %v619
    %637 = vmatprep.subr.bf16.mxu0 0
    %638 = vmatpush2.bf16.xpose.msra.mxu0 0
    %639 = vmatprep.subr.bf16.mxu0 0
    %640 = vmatpush2.bf16.xpose.msra.mxu0 0
    %641 = vmatprep.subr.bf16.mxu0 0
    %642 = vmatpush2.bf16.xpose.msra.mxu0 0
    %643 = vmatprep.subr.bf16.mxu0 0
    %644 = vmatpush2.bf16.xpose.msra.mxu0 0
    %645 = vmatprep.subr.bf16.mxu0 0
    %646 = vmatpush2.bf16.xpose.msra.mxu0 0
    %647 = vmatprep.subr.bf16.mxu0 0
    %648 = vmatpush2.bf16.xpose.msra.mxu0 0
    %649 = vmatprep.subr.bf16.mxu0 0
    %650 = vmatpush2.bf16.xpose.msra.mxu0 0
    %651 = vmatprep.subr.bf16.mxu0 0
    %652 = vmatpush2.bf16.xpose.msra.mxu0 0
    %653 = vmatprep.mubr.bf16.mxu0 0
    %654 = vmatmul.mubr.bf16.gmra.mxu0 %v616
    %v655 = vpop.f32.mrf.mxu0
    %v656 = vadd.f32 %v609, %v655
    %v657 = vpop.f32.mrf.mxu0
    %v658 = vpop.f32.mrf.mxu0
    %v659 = vpop.f32.mrf.mxu0
    %660 = vdwg.mxu0
    %v661 = vsel %vm132, %v656, -inf
    %662 = vmax.xlane.f32.xlu0 %v661
    %v663 = vpop.xlane.xlu0 %662
    %v664 = vsub.f32 %v656, %v663
    %v665 = vmul.f32 %v664, 1.442695
    %v666 = vpow.pop %v665
    %v667 = vsel %vm132, %v666, 0.0
    %668 = vadd.xlane.f32.xlu0 %v667
    %v669 = vpop.xlane.xlu0 %668
    %v670 = vrcp.pop %v669
    %v671 = vmul.f32 %v666, %v670
    %v672 = vpack.c.bf16 %v671, %v671
    %673 = vrot.lane.b32.xlu0 %v612, 64
    %v674 = vpop.permute.xlu0 %673
    %v676 = vsel %vm132, %v672, 0
    %v679 = vsel %vm196, %v674, 0
    %681 = vmatprep.subr.bf16.mxu0 0
    %682 = vmatpush1.bf16.msra.mxu0 0
    %683 = vmatprep.subr.bf16.mxu0 0
    %684 = vmatpush1.bf16.msra.mxu0 0
    %685 = vmatprep.subr.bf16.mxu0 0
    %686 = vmatpush1.bf16.msra.mxu0 0
    %687 = vmatprep.subr.bf16.mxu0 0
    %688 = vmatpush1.bf16.msra.mxu0 0
    %689 = vmatprep.subr.bf16.mxu0 0
    %690 = vmatpush1.bf16.msra.mxu0 0
    %691 = vmatprep.subr.bf16.mxu0 0
    %692 = vmatpush1.bf16.msra.mxu0 0
    %693 = vmatprep.subr.bf16.mxu0 0
    %694 = vmatpush1.bf16.msra.mxu0 0
    %695 = vmatprep.subr.bf16.mxu0 0
    %696 = vmatpush1.bf16.msra.mxu0 %v679
    %697 = vmatprep.subr.bf16.mxu0 0
    %698 = vmatpush2.bf16.msra.mxu0 0
    %699 = vmatprep.subr.bf16.mxu0 0
    %700 = vmatpush2.bf16.msra.mxu0 0
    %701 = vmatprep.subr.bf16.mxu0 0
    %702 = vmatpush2.bf16.msra.mxu0 0
    %703 = vmatprep.subr.bf16.mxu0 0
    %704 = vmatpush2.bf16.msra.mxu0 0
    %705 = vmatprep.subr.bf16.mxu0 0
    %706 = vmatpush2.bf16.msra.mxu0 0
    %707 = vmatprep.subr.bf16.mxu0 0
    %708 = vmatpush2.bf16.msra.mxu0 0
    %709 = vmatprep.subr.bf16.mxu0 0
    %710 = vmatpush2.bf16.msra.mxu0 0
    %711 = vmatprep.subr.bf16.mxu0 0
    %712 = vmatpush2.bf16.msra.mxu0 0
    %713 = vmatprep.mubr.bf16.mxu0 0
    %714 = vmatmul.mubr.bf16.gmra.mxu0 %v676
    %v715 = vpop.f32.mrf.mxu0
    %v716 = vadd.f32 0.0, %v715
    %v717 = vpop.f32.mrf.mxu0
    %v718 = vpop.f32.mrf.mxu0
    %v719 = vpop.f32.mrf.mxu0
    %720 = vdwg.mxu0
    %722 = vset.pattern.permute.xlu0 0
    %723 = vperm.xlu0 %722, %v600
    %v724 = vpop.permute.xlu0 %723
    %v726 = vmul.f32 %v716, %v724
    %s727 = scalar_lea.vmem [#allocation5], 8
    %728 = vst.msk [vmem:[%s727] sm:$0xff] %vm132, %v726
    %729 = vrot.lane.b32.xlu0 %v611, 120
    %v730 = vpop.permute.xlu0 %729
    %731 = vrot.lane.b32.xlu0 %v612, 88
    %v732 = vpop.permute.xlu0 %731
    %v734 = vsel %vm132, %v730, 0
    %v737 = vsel %vm132, %v732, 0
    %739 = vmatprep.subr.bf16.mxu0 0
    %740 = vmatpush1.bf16.xpose.msra.mxu0 0
    %741 = vmatprep.subr.bf16.mxu0 0
    %742 = vmatpush1.bf16.xpose.msra.mxu0 0
    %743 = vmatprep.subr.bf16.mxu0 0
    %744 = vmatpush1.bf16.xpose.msra.mxu0 0
    %745 = vmatprep.subr.bf16.mxu0 0
    %746 = vmatpush1.bf16.xpose.msra.mxu0 0
    %747 = vmatprep.subr.bf16.mxu0 0
    %748 = vmatpush1.bf16.xpose.msra.mxu0 0
    %749 = vmatprep.subr.bf16.mxu0 0
    %750 = vmatpush1.bf16.xpose.msra.mxu0 0
    %751 = vmatprep.subr.bf16.mxu0 0
    %752 = vmatpush1.bf16.xpose.msra.mxu0 0
    %753 = vmatprep.subr.bf16.mxu0 0
    %754 = vmatpush1.bf16.xpose.msra.mxu0 %v737
    %755 = vmatprep.subr.bf16.mxu0 0
    %756 = vmatpush2.bf16.xpose.msra.mxu0 0
    %757 = vmatprep.subr.bf16.mxu0 0
    %758 = vmatpush2.bf16.xpose.msra.mxu0 0
    %759 = vmatprep.subr.bf16.mxu0 0
    %760 = vmatpush2.bf16.xpose.msra.mxu0 0
    %761 = vmatprep.subr.bf16.mxu0 0
    %762 = vmatpush2.bf16.xpose.msra.mxu0 0
    %763 = vmatprep.subr.bf16.mxu0 0
    %764 = vmatpush2.bf16.xpose.msra.mxu0 0
    %765 = vmatprep.subr.bf16.mxu0 0
    %766 = vmatpush2.bf16.xpose.msra.mxu0 0
    %767 = vmatprep.subr.bf16.mxu0 0
    %768 = vmatpush2.bf16.xpose.msra.mxu0 0
    %769 = vmatprep.subr.bf16.mxu0 0
    %770 = vmatpush2.bf16.xpose.msra.mxu0 0
    %771 = vmatprep.mubr.bf16.mxu0 0
    %772 = vmatmul.mubr.bf16.gmra.mxu0 %v734
    %v773 = vpop.f32.mrf.mxu0
    %v774 = vadd.f32 %v609, %v773
    %v775 = vpop.f32.mrf.mxu0
    %v776 = vpop.f32.mrf.mxu0
    %v777 = vpop.f32.mrf.mxu0
    %778 = vdwg.mxu0
    %v779 = vsel %vm132, %v774, -inf
    %780 = vmax.xlane.f32.xlu0 %v779
    %v781 = vpop.xlane.xlu0 %780
    %v782 = vsub.f32 %v774, %v781
    %v783 = vmul.f32 %v782, 1.442695
    %v784 = vpow.pop %v783
    %v785 = vsel %vm132, %v784, 0.0
    %786 = vadd.xlane.f32.xlu0 %v785
    %v787 = vpop.xlane.xlu0 %786
    %v788 = vrcp.pop %v787
    %v789 = vmul.f32 %v784, %v788
    %v790 = vpack.c.bf16 %v789, %v789
    %791 = vrot.lane.b32.xlu0 %v612, 56
    %v792 = vpop.permute.xlu0 %791
    %v794 = vsel %vm132, %v790, 0
    %v797 = vsel %vm196, %v792, 0
    %799 = vmatprep.subr.bf16.mxu0 0
    %800 = vmatpush1.bf16.msra.mxu0 0
    %801 = vmatprep.subr.bf16.mxu0 0
    %802 = vmatpush1.bf16.msra.mxu0 0
    %803 = vmatprep.subr.bf16.mxu0 0
    %804 = vmatpush1.bf16.msra.mxu0 0
    %805 = vmatprep.subr.bf16.mxu0 0
    %806 = vmatpush1.bf16.msra.mxu0 0
    %807 = vmatprep.subr.bf16.mxu0 0
    %808 = vmatpush1.bf16.msra.mxu0 0
    %809 = vmatprep.subr.bf16.mxu0 0
    %810 = vmatpush1.bf16.msra.mxu0 0
    %811 = vmatprep.subr.bf16.mxu0 0
    %812 = vmatpush1.bf16.msra.mxu0 0
    %813 = vmatprep.subr.bf16.mxu0 0
    %814 = vmatpush1.bf16.msra.mxu0 %v797
    %815 = vmatprep.subr.bf16.mxu0 0
    %816 = vmatpush2.bf16.msra.mxu0 0
    %817 = vmatprep.subr.bf16.mxu0 0
    %818 = vmatpush2.bf16.msra.mxu0 0
    %819 = vmatprep.subr.bf16.mxu0 0
    %820 = vmatpush2.bf16.msra.mxu0 0
    %821 = vmatprep.subr.bf16.mxu0 0
    %822 = vmatpush2.bf16.msra.mxu0 0
    %823 = vmatprep.subr.bf16.mxu0 0
    %824 = vmatpush2.bf16.msra.mxu0 0
    %825 = vmatprep.subr.bf16.mxu0 0
    %826 = vmatpush2.bf16.msra.mxu0 0
    %827 = vmatprep.subr.bf16.mxu0 0
    %828 = vmatpush2.bf16.msra.mxu0 0
    %829 = vmatprep.subr.bf16.mxu0 0
    %830 = vmatpush2.bf16.msra.mxu0 0
    %831 = vmatprep.mubr.bf16.mxu0 0
    %832 = vmatmul.mubr.bf16.gmra.mxu0 %v794
    %v833 = vpop.f32.mrf.mxu0
    %v834 = vadd.f32 0.0, %v833
    %v835 = vpop.f32.mrf.mxu0
    %v836 = vpop.f32.mrf.mxu0
    %v837 = vpop.f32.mrf.mxu0
    %838 = vdwg.mxu0
    %v839 = vmul.f32 %v834, %v724
    %841 = vrot.lane.b32.xlu0 %v839, 8
    %v842 = vpop.permute.xlu0 %841
    %844 = vst.msk [vmem:[%s727] sm:$0xff] %vm363, %v842
    %845 = vrot.lane.b32.xlu0 %v611, 112
    %v846 = vpop.permute.xlu0 %845
    %847 = vrot.lane.b32.xlu0 %v612, 80
    %v848 = vpop.permute.xlu0 %847
    %v850 = vsel %vm132, %v846, 0
    %v853 = vsel %vm132, %v848, 0
    %855 = vmatprep.subr.bf16.mxu0 0
    %856 = vmatpush1.bf16.xpose.msra.mxu0 0
    %857 = vmatprep.subr.bf16.mxu0 0
    %858 = vmatpush1.bf16.xpose.msra.mxu0 0
    %859 = vmatprep.subr.bf16.mxu0 0
    %860 = vmatpush1.bf16.xpose.msra.mxu0 0
    %861 = vmatprep.subr.bf16.mxu0 0
    %862 = vmatpush1.bf16.xpose.msra.mxu0 0
    %863 = vmatprep.subr.bf16.mxu0 0
    %864 = vmatpush1.bf16.xpose.msra.mxu0 0
    %865 = vmatprep.subr.bf16.mxu0 0
    %866 = vmatpush1.bf16.xpose.msra.mxu0 0
    %867 = vmatprep.subr.bf16.mxu0 0
    %868 = vmatpush1.bf16.xpose.msra.mxu0 0
    %869 = vmatprep.subr.bf16.mxu0 0
    %870 = vmatpush1.bf16.xpose.msra.mxu0 %v853
    %871 = vmatprep.subr.bf16.mxu0 0
    %872 = vmatpush2.bf16.xpose.msra.mxu0 0
    %873 = vmatprep.subr.bf16.mxu0 0
    %874 = vmatpush2.bf16.xpose.msra.mxu0 0
    %875 = vmatprep.subr.bf16.mxu0 0
    %876 = vmatpush2.bf16.xpose.msra.mxu0 0
    %877 = vmatprep.subr.bf16.mxu0 0
    %878 = vmatpush2.bf16.xpose.msra.mxu0 0
    %879 = vmatprep.subr.bf16.mxu0 0
    %880 = vmatpush2.bf16.xpose.msra.mxu0 0
    %881 = vmatprep.subr.bf16.mxu0 0
    %882 = vmatpush2.bf16.xpose.msra.mxu0 0
    %883 = vmatprep.subr.bf16.mxu0 0
    %884 = vmatpush2.bf16.xpose.msra.mxu0 0
    %885 = vmatprep.subr.bf16.mxu0 0
    %886 = vmatpush2.bf16.xpose.msra.mxu0 0
    %887 = vmatprep.mubr.bf16.mxu0 0
    %888 = vmatmul.mubr.bf16.gmra.mxu0 %v850
    %v889 = vpop.f32.mrf.mxu0
    %v890 = vadd.f32 %v609, %v889
    %v891 = vpop.f32.mrf.mxu0
    %v892 = vpop.f32.mrf.mxu0
    %v893 = vpop.f32.mrf.mxu0
    %894 = vdwg.mxu0
    %v895 = vsel %vm132, %v890, -inf
    %896 = vmax.xlane.f32.xlu0 %v895
    %v897 = vpop.xlane.xlu0 %896
    %v898 = vsub.f32 %v890, %v897
    %v899 = vmul.f32 %v898, 1.442695
    %v900 = vpow.pop %v899
    %v901 = vsel %vm132, %v900, 0.0
    %902 = vadd.xlane.f32.xlu0 %v901
    %v903 = vpop.xlane.xlu0 %902
    %v904 = vrcp.pop %v903
    %v905 = vmul.f32 %v900, %v904
    %v906 = vpack.c.bf16 %v905, %v905
    %907 = vrot.lane.b32.xlu0 %v612, 48
    %v908 = vpop.permute.xlu0 %907
    %v910 = vsel %vm132, %v906, 0
    %v913 = vsel %vm196, %v908, 0
    %915 = vmatprep.subr.bf16.mxu0 0
    %916 = vmatpush1.bf16.msra.mxu0 0
    %917 = vmatprep.subr.bf16.mxu0 0
    %918 = vmatpush1.bf16.msra.mxu0 0
    %919 = vmatprep.subr.bf16.mxu0 0
    %920 = vmatpush1.bf16.msra.mxu0 0
    %921 = vmatprep.subr.bf16.mxu0 0
    %922 = vmatpush1.bf16.msra.mxu0 0
    %923 = vmatprep.subr.bf16.mxu0 0
    %924 = vmatpush1.bf16.msra.mxu0 0
    %925 = vmatprep.subr.bf16.mxu0 0
    %926 = vmatpush1.bf16.msra.mxu0 0
    %927 = vmatprep.subr.bf16.mxu0 0
    %928 = vmatpush1.bf16.msra.mxu0 0
    %929 = vmatprep.subr.bf16.mxu0 0
    %930 = vmatpush1.bf16.msra.mxu0 %v913
    %931 = vmatprep.subr.bf16.mxu0 0
    %932 = vmatpush2.bf16.msra.mxu0 0
    %933 = vmatprep.subr.bf16.mxu0 0
    %934 = vmatpush2.bf16.msra.mxu0 0
    %935 = vmatprep.subr.bf16.mxu0 0
    %936 = vmatpush2.bf16.msra.mxu0 0
    %937 = vmatprep.subr.bf16.mxu0 0
    %938 = vmatpush2.bf16.msra.mxu0 0
    %939 = vmatprep.subr.bf16.mxu0 0
    %940 = vmatpush2.bf16.msra.mxu0 0
    %941 = vmatprep.subr.bf16.mxu0 0
    %942 = vmatpush2.bf16.msra.mxu0 0
    %943 = vmatprep.subr.bf16.mxu0 0
    %944 = vmatpush2.bf16.msra.mxu0 0
    %945 = vmatprep.subr.bf16.mxu0 0
    %946 = vmatpush2.bf16.msra.mxu0 0
    %947 = vmatprep.mubr.bf16.mxu0 0
    %948 = vmatmul.mubr.bf16.gmra.mxu0 %v910
    %v949 = vpop.f32.mrf.mxu0
    %v950 = vadd.f32 0.0, %v949
    %v951 = vpop.f32.mrf.mxu0
    %v952 = vpop.f32.mrf.mxu0
    %v953 = vpop.f32.mrf.mxu0
    %954 = vdwg.mxu0
    %v955 = vmul.f32 %v950, %v724
    %957 = vrot.lane.b32.xlu0 %v955, 16
    %v958 = vpop.permute.xlu0 %957
    %960 = vst.msk [vmem:[%s727] sm:$0xff] %vm480, %v958
    %961 = vrot.lane.b32.xlu0 %v611, 104
    %v962 = vpop.permute.xlu0 %961
    %963 = vrot.lane.b32.xlu0 %v612, 72
    %v964 = vpop.permute.xlu0 %963
    %v966 = vsel %vm132, %v962, 0
    %v969 = vsel %vm132, %v964, 0
    %971 = vmatprep.subr.bf16.mxu0 0
    %972 = vmatpush1.bf16.xpose.msra.mxu0 0
    %973 = vmatprep.subr.bf16.mxu0 0
    %974 = vmatpush1.bf16.xpose.msra.mxu0 0
    %975 = vmatprep.subr.bf16.mxu0 0
    %976 = vmatpush1.bf16.xpose.msra.mxu0 0
    %977 = vmatprep.subr.bf16.mxu0 0
    %978 = vmatpush1.bf16.xpose.msra.mxu0 0
    %979 = vmatprep.subr.bf16.mxu0 0
    %980 = vmatpush1.bf16.xpose.msra.mxu0 0
    %981 = vmatprep.subr.bf16.mxu0 0
    %982 = vmatpush1.bf16.xpose.msra.mxu0 0
    %983 = vmatprep.subr.bf16.mxu0 0
    %984 = vmatpush1.bf16.xpose.msra.mxu0 0
    %985 = vmatprep.subr.bf16.mxu0 0
    %986 = vmatpush1.bf16.xpose.msra.mxu0 %v969
    %987 = vmatprep.subr.bf16.mxu0 0
    %988 = vmatpush2.bf16.xpose.msra.mxu0 0
    %989 = vmatprep.subr.bf16.mxu0 0
    %990 = vmatpush2.bf16.xpose.msra.mxu0 0
    %991 = vmatprep.subr.bf16.mxu0 0
    %992 = vmatpush2.bf16.xpose.msra.mxu0 0
    %993 = vmatprep.subr.bf16.mxu0 0
    %994 = vmatpush2.bf16.xpose.msra.mxu0 0
    %995 = vmatprep.subr.bf16.mxu0 0
    %996 = vmatpush2.bf16.xpose.msra.mxu0 0
    %997 = vmatprep.subr.bf16.mxu0 0
    %998 = vmatpush2.bf16.xpose.msra.mxu0 0
    %999 = vmatprep.subr.bf16.mxu0 0
    %1000 = vmatpush2.bf16.xpose.msra.mxu0 0
    %1001 = vmatprep.subr.bf16.mxu0 0
    %1002 = vmatpush2.bf16.xpose.msra.mxu0 0
    %1003 = vmatprep.mubr.bf16.mxu0 0
    %1004 = vmatmul.mubr.bf16.gmra.mxu0 %v966
    %v1005 = vpop.f32.mrf.mxu0
    %v1006 = vadd.f32 %v609, %v1005
    %v1007 = vpop.f32.mrf.mxu0
    %v1008 = vpop.f32.mrf.mxu0
    %v1009 = vpop.f32.mrf.mxu0
    %1010 = vdwg.mxu0
    %v1011 = vsel %vm132, %v1006, -inf
    %1012 = vmax.xlane.f32.xlu0 %v1011
    %v1013 = vpop.xlane.xlu0 %1012
    %v1014 = vsub.f32 %v1006, %v1013
    %v1015 = vmul.f32 %v1014, 1.442695
    %v1016 = vpow.pop %v1015
    %v1017 = vsel %vm132, %v1016, 0.0
    %1018 = vadd.xlane.f32.xlu0 %v1017
    %v1019 = vpop.xlane.xlu0 %1018
    %v1020 = vrcp.pop %v1019
    %v1021 = vmul.f32 %v1016, %v1020
    %v1022 = vpack.c.bf16 %v1021, %v1021
    %1023 = vrot.lane.b32.xlu0 %v612, 40
    %v1024 = vpop.permute.xlu0 %1023
    %v1026 = vsel %vm132, %v1022, 0
    %v1029 = vsel %vm196, %v1024, 0
    %1031 = vmatprep.subr.bf16.mxu0 0
    %1032 = vmatpush1.bf16.msra.mxu0 0
    %1033 = vmatprep.subr.bf16.mxu0 0
    %1034 = vmatpush1.bf16.msra.mxu0 0
    %1035 = vmatprep.subr.bf16.mxu0 0
    %1036 = vmatpush1.bf16.msra.mxu0 0
    %1037 = vmatprep.subr.bf16.mxu0 0
    %1038 = vmatpush1.bf16.msra.mxu0 0
    %1039 = vmatprep.subr.bf16.mxu0 0
    %1040 = vmatpush1.bf16.msra.mxu0 0
    %1041 = vmatprep.subr.bf16.mxu0 0
    %1042 = vmatpush1.bf16.msra.mxu0 0
    %1043 = vmatprep.subr.bf16.mxu0 0
    %1044 = vmatpush1.bf16.msra.mxu0 0
    %1045 = vmatprep.subr.bf16.mxu0 0
    %1046 = vmatpush1.bf16.msra.mxu0 %v1029
    %1047 = vmatprep.subr.bf16.mxu0 0
    %1048 = vmatpush2.bf16.msra.mxu0 0
    %1049 = vmatprep.subr.bf16.mxu0 0
    %1050 = vmatpush2.bf16.msra.mxu0 0
    %1051 = vmatprep.subr.bf16.mxu0 0
    %1052 = vmatpush2.bf16.msra.mxu0 0
    %1053 = vmatprep.subr.bf16.mxu0 0
    %1054 = vmatpush2.bf16.msra.mxu0 0
    %1055 = vmatprep.subr.bf16.mxu0 0
    %1056 = vmatpush2.bf16.msra.mxu0 0
    %1057 = vmatprep.subr.bf16.mxu0 0
    %1058 = vmatpush2.bf16.msra.mxu0 0
    %1059 = vmatprep.subr.bf16.mxu0 0
    %1060 = vmatpush2.bf16.msra.mxu0 0
    %1061 = vmatprep.subr.bf16.mxu0 0
    %1062 = vmatpush2.bf16.msra.mxu0 0
    %1063 = vmatprep.mubr.bf16.mxu0 0
    %1064 = vmatmul.mubr.bf16.gmra.mxu0 %v1026
    %v1065 = vpop.f32.mrf.mxu0
    %v1066 = vadd.f32 0.0, %v1065
    %v1067 = vpop.f32.mrf.mxu0
    %v1068 = vpop.f32.mrf.mxu0
    %v1069 = vpop.f32.mrf.mxu0
    %1070 = vdwg.mxu0
    %v1071 = vmul.f32 %v1066, %v724
    %1073 = vrot.lane.b32.xlu0 %v1071, 24
    %v1074 = vpop.permute.xlu0 %1073
    %1076 = vst.msk [vmem:[%s727] sm:$0xff] %vm597, %v1074
    // Predicated region
    $region26: #{tpu_custom_call.1} parent=1 // pred_check
      _
    $region27: #{tpu_custom_call.1} parent=1 // pred_check_branch
      %1078 = sbr.rel (0) target = $region29
    $region28: #{tpu_custom_call.1} parent=1 // pred_region
      %s1080 = ssub.s32 256, 256
      %1081 = vsyncadd [#allocation4], %s1080
      %s1082 = sshll.u32 [#allocation5], 4
      %s1083 = int_to_ptr.vmem [resolvable:$true] %s1082
      %1088 = dma.vmem_to_hbm [thread:$0]  %s1083, 256, %s5, [#allocation4], 128, 128, 8
    $region29: #{tpu_custom_call.1} parent=1 // pred_fallthru
      _
    // Predicated region
    $region30: #{tpu_custom_call.1} parent=1 // pred_check
      _
    $region31: #{tpu_custom_call.1} parent=1 // pred_check_branch
      %1090 = sbr.rel (0) target = $region33
    $region32: #{tpu_custom_call.1} parent=1 // pred_region
      %1091 = dma.done [#allocation4], 256
    $region33: #{tpu_custom_call.1} parent=1 // pred_fallthru
      _
    %1092 = vsyncpa [#allocation3], 1
    %1093 = vsyncpa [#allocation4], 1

</llo_original>
